<compile_context>
chip_gen: v7x
topology: tpu7x:2x2x1
jax: 0.10.0
libtpu: 0.0.40
codegen_flags: <defaults>
</compile_context>

<pallas_src>
import functools
import re

import jax
import jax.numpy as jnp
from jax.experimental import pallas as pl
from jax.experimental.pallas import tpu as pltpu


# ----------------------------------------------------------------------------
# helpers
# ----------------------------------------------------------------------------
def _round_up(n, m):
    return ((n + m - 1) // m) * m


def _cdiv(a, b):
    return (a + b - 1) // b


def _pad2d(a, rows, cols, dtype=None):
    """Cast (optional) and zero-pad a 2D array up to (rows, cols)."""
    a = jnp.asarray(a)
    if dtype is not None:
        a = a.astype(dtype)
    return jnp.pad(a, ((0, rows - a.shape[0]), (0, cols - a.shape[1])))


def _tpu_generation():
    """Best-effort TPU generation number (5 for v5e, 6 for v6e, 7 for v7x)."""
    try:
        kind = jax.devices()[0].device_kind.lower()
        m = re.search(r"\d+", kind)
        return int(m.group(0)) if m else None
    except Exception:
        return None


# ----------------------------------------------------------------------------
# kernels
# ----------------------------------------------------------------------------
def _mlp(x, w1_ref, w2_ref, w3_ref, w4_ref, b_ref, cdt):
    """4 x (Linear -> tanh). MXU operands in `cdt` (bf16 or f32), f32 accumulate,
    f32 bias add and tanh.  Padded lanes stay exactly zero (zero weights/bias)."""
    h = jnp.tanh(jnp.dot(x, w1_ref[...],
                         preferred_element_type=jnp.float32) + b_ref[0:1, :])
    h = jnp.tanh(jnp.dot(h.astype(cdt), w2_ref[...],
                         preferred_element_type=jnp.float32) + b_ref[1:2, :])
    h = jnp.tanh(jnp.dot(h.astype(cdt), w3_ref[...],
                         preferred_element_type=jnp.float32) + b_ref[2:3, :])
    h = jnp.tanh(jnp.dot(h.astype(cdt), w4_ref[...],
                         preferred_element_type=jnp.float32) + b_ref[3:4, :])
    return h


def _koopman_kernel_fused(x_ref, w1_ref, w2_ref, w3_ref, w4_ref, b_ref,
                          ktp_ref, h_ref, zn_ref, zb_ref, *, sp):
    """v6e/v7x variant: single full-depth (K = Sp+Hp) contraction for z_next."""
    cdt = x_ref.dtype
    x = x_ref[...]                                                    # (Tt, Sp)
    h = _mlp(x, w1_ref, w2_ref, w3_ref, w4_ref, b_ref, cdt)          # (Tt, Hp) f32
    h_ref[...] = h
    # Assemble padded z = [x | h] with two 128-aligned static-slice stores,
    # then one K=256 dot -> fills the 256-deep MXU instead of two half pushes.
    zb_ref[:, :sp] = x
    zb_ref[:, sp:] = h.astype(cdt)
    zn_ref[...] = jnp.dot(zb_ref[...], ktp_ref[...],
                          preferred_element_type=jnp.float32)         # (Tt, Ap)


def _koopman_kernel_split(x_ref, w1_ref, w2_ref, w3_ref, w4_ref, b_ref,
                          ktx_ref, kth_ref, h_ref, zn_ref):
    """v5e variant (128-deep MXU): two K=128 dots already fill the array."""
    cdt = x_ref.dtype
    x = x_ref[...]                                                    # (Tt, Sp)
    h = _mlp(x, w1_ref, w2_ref, w3_ref, w4_ref, b_ref, cdt)          # (Tt, Hp) f32
    h_ref[...] = h
    zn_ref[...] = (jnp.dot(x, ktx_ref[...], preferred_element_type=jnp.float32)
                   + jnp.dot(h.astype(cdt), kth_ref[...],
                             preferred_element_type=jnp.float32))     # (Tt, Ap)


# ----------------------------------------------------------------------------
# wrapper
# ----------------------------------------------------------------------------
def koopman_autoencoder_forward(x, params, *, use_bf16=True, tile_cap=None,
                                min_kernel_rows=128):
    """x: (T, state_dim) float32. Returns (x_hat, z, z_next) as in the module."""
    T, S = x.shape
    H = params["w1"].shape[0]           # nn.Linear weight is (out, in)
    A = S + H
    x = x.astype(jnp.float32)

    # Small-problem fallback: for tiny T, (8,128) padding + launch/DMA fixed
    # cost dominate -- plain XLA wins and stays exact.
    if T < min_kernel_rows:
        return _reference_forward(x, params)

    gen = _tpu_generation()
    fuse_k = (gen is None) or (gen >= 6)          # 256-deep MXU on v6e/v7x
    if tile_cap is None:
        tile_cap = 4096 if gen == 6 else 2048     # v6e has the most VMEM slack
    vmem_limit = (48 << 20) if (gen is not None and gen >= 7) else (64 << 20)

    cdt = jnp.bfloat16 if use_bf16 else jnp.float32

    # Lane-padded feature widths (everything 128-aligned -> unmasked vst/vld).
    Sp = _round_up(S, 128)
    Hp = _round_up(H, 128)
    Ap = _round_up(A, 128)
    Zp = Sp + Hp

    # Adaptive row tiling: split T into >=2 near-equal chunks, each a multiple
    # of 8 rows -> at most 7 padded rows total, and the grid always has >=2
    # steps so "parallel" can shard T across TensorCores on v7x.
    n_tiles = max(_cdiv(T, tile_cap), 2)
    tile_t = _round_up(_cdiv(T, n_tiles), 8)
    T_pad = n_tiles * tile_t

    xp = _pad2d(x, T_pad, Sp, cdt)

    # PyTorch (out, in) weights -> (in, out), padded, MXU-operand dtype.
    w1p = _pad2d(params["w1"].T, Sp, Hp, cdt)
    w2p = _pad2d(params["w2"].T, Hp, Hp, cdt)
    w3p = _pad2d(params["w3"].T, Hp, Hp, cdt)
    w4p = _pad2d(params["w4"].T, Hp, Hp, cdt)

    # Pack the four biases into one aligned (8, Hp) f32 block (single DMA).
    bias = jnp.zeros((8, Hp), jnp.float32)
    for i, name in enumerate(("b1", "b2", "b3", "b4")):
        bias = bias.at[i, :H].set(params[name].astype(jnp.float32))

    kt = params["K"].T.astype(jnp.float32)
    if fuse_k:
        # Pre-concatenated padded K.T matching the [x | h] scratch layout.
        ktp = jnp.zeros((Zp, Ap), jnp.float32)
        ktp = ktp.at[:S, :A].set(kt[:S, :])
        ktp = ktp.at[Sp:Sp + H, :A].set(kt[S:, :])
        k_ops = (ktp.astype(cdt),)
    else:
        k_ops = (_pad2d(kt[:S, :], Sp, Ap, cdt),
                 _pad2d(kt[S:, :], Hp, Ap, cdt))

    def row_spec(cols):
        return pl.BlockSpec((tile_t, cols), lambda i: (i, 0))

    # Grid-constant blocks are never re-fetched; once their double-buffered
    # footprint gets big (large hidden_dim, v7x 64 MiB VMEM) drop them to a
    # single pipeline buffer.  At small hidden sizes keep the default path.
    itemsize = jnp.dtype(cdt).itemsize
    const_bytes = (w1p.size + w2p.size + w3p.size + w4p.size
                   + sum(k.size for k in k_ops)) * itemsize + bias.size * 4
    single_buffer_consts = (2 * const_bytes) > (8 << 20)

    def const_spec(shape):
        if single_buffer_consts:
            return pl.BlockSpec(shape, lambda i: (0, 0),
                                pipeline_mode=pl.Buffered(1))
        return pl.BlockSpec(shape, lambda i: (0, 0))

    if fuse_k:
        kernel = functools.partial(_koopman_kernel_fused, sp=Sp)
        k_specs = [const_spec((Zp, Ap))]
        scratch = [pltpu.VMEM((tile_t, Zp), cdt)]
    else:
        kernel = _koopman_kernel_split
        k_specs = [const_spec((Sp, Ap)), const_spec((Hp, Ap))]
        scratch = []

    h_out, zn_out = pl.pallas_call(
        kernel,
        out_shape=(
            jax.ShapeDtypeStruct((T_pad, Hp), jnp.float32),   # MLP output h
            jax.ShapeDtypeStruct((T_pad, Ap), jnp.float32),   # z_next (padded)
        ),
        grid_spec=pltpu.PrefetchScalarGridSpec(
            num_scalar_prefetch=0,
            grid=(n_tiles,),
            in_specs=[row_spec(Sp),                           # x row tile
                      const_spec((Sp, Hp)),                   # W1
                      const_spec((Hp, Hp)),                   # W2
                      const_spec((Hp, Hp)),                   # W3
                      const_spec((Hp, Hp)),                   # W4
                      const_spec((8, Hp))] + k_specs,         # biases, K.T
            out_specs=[row_spec(Hp), row_spec(Ap)],
            scratch_shapes=scratch,
        ),
        compiler_params=pltpu.CompilerParams(
            dimension_semantics=("parallel",),
            vmem_limit_bytes=vmem_limit),
    )(xp, w1p, w2p, w3p, w4p, bias, *k_ops)

    # Un-pad / assemble in the wrapper (cheap XLA slices/concat).
    h = h_out[:T, :H]
    z = jnp.concatenate([x, h], axis=-1)
    z_next = zn_out[:T, :A]
    x_hat = z[:, :S]                     # Decoder == Identity on first S feats
    return x_hat, z, z_next


# ----------------------------------------------------------------------------
# parameters & pure-JAX reference
# ----------------------------------------------------------------------------
def init_params(key, state_dim, hidden_dim):
    """Deterministic synthetic parameters matching nn.Linear shapes."""
    ks = jax.random.split(key, 8)

    def linear(kw, kb, out_d, in_d):
        bound = 1.0 / jnp.sqrt(in_d)
        w = jax.random.uniform(kw, (out_d, in_d), jnp.float32, -bound, bound)
        b = jax.random.uniform(kb, (out_d,), jnp.float32, -bound, bound)
        return w, b

    w1, b1 = linear(ks[0], ks[1], hidden_dim, state_dim)
    w2, b2 = linear(ks[2], ks[3], hidden_dim, hidden_dim)
    w3, b3 = linear(ks[4], ks[5], hidden_dim, hidden_dim)
    w4, b4 = linear(ks[6], ks[7], hidden_dim, hidden_dim)
    K = jnp.eye(state_dim + hidden_dim, dtype=jnp.float32)  # as in __init__
    return dict(w1=w1, b1=b1, w2=w2, b2=b2, w3=w3, b3=b3, w4=w4, b4=b4, K=K)


def _reference_forward(x, p):
    """Pure-JAX reference mirroring the PyTorch module (f32)."""
    x = x.astype(jnp.float32)
    h = x
    for w, b in ((p["w1"], p["b1"]), (p["w2"], p["b2"]),
                 (p["w3"], p["b3"]), (p["w4"], p["b4"])):
        h = jnp.tanh(h @ w.T.astype(jnp.float32) + b.astype(jnp.float32))
    z = jnp.concatenate([x, h], axis=-1)
    z_next = z @ p["K"].T
    x_hat = z[:, : x.shape[1]]
    return x_hat, z, z_next


# ----------------------------------------------------------------------------
# self-test
# ----------------------------------------------------------------------------
if __name__ == "__main__":
    state_dim = 4
    hidden_dim = 32

    key = jax.random.PRNGKey(0)
    kx1, kx2, kp = jax.random.split(key, 3)
    params = init_params(kp, state_dim, hidden_dim)

    # --- toy size (T=8): routed to the small-problem fallback, exact ---
    x_small = jax.random.normal(kx1, (8, state_dim), dtype=jnp.float32)
    xh_s, z_s, zn_s = koopman_autoencoder_forward(x_small, params)
    jax.block_until_ready((xh_s, z_s, zn_s))
    rs = _reference_forward(x_small, params)
    assert xh_s.shape == (8, state_dim)
    assert z_s.shape == (8, state_dim + hidden_dim)
    assert zn_s.shape == (8, state_dim + hidden_dim)
    assert jnp.allclose(xh_s, rs[0], atol=1e-5)
    assert jnp.allclose(z_s, rs[1], atol=1e-5)
    assert jnp.allclose(zn_s, rs[2], atol=1e-5)

    # --- kernel path, exact f32 mode (validates kernel numerics) ---
    T = 300   # odd size: exercises adaptive tiling + row padding + 2-step grid
    x_big = jax.random.normal(kx2, (T, state_dim), dtype=jnp.float32)
    rb = _reference_forward(x_big, params)

    xh_f, z_f, zn_f = koopman_autoencoder_forward(x_big, params, use_bf16=False)
    jax.block_until_ready((xh_f, z_f, zn_f))
    assert xh_f.shape == (T, state_dim)
    assert z_f.shape == (T, state_dim + hidden_dim)
    assert zn_f.shape == (T, state_dim + hidden_dim)
    assert jnp.allclose(xh_f, rb[0], atol=1e-5)
    assert jnp.allclose(z_f, rb[1], atol=1e-5)
    assert jnp.allclose(zn_f, rb[2], atol=1e-5)

    # --- kernel path, default bf16 fast mode (f32 accumulation) ---
    xh_b, z_b, zn_b = koopman_autoencoder_forward(x_big, params)
    jax.block_until_ready((xh_b, z_b, zn_b))
    assert jnp.allclose(xh_b, rb[0], atol=3e-2, rtol=3e-2)
    assert jnp.allclose(z_b, rb[1], atol=3e-2, rtol=3e-2)
    assert jnp.allclose(zn_b, rb[2], atol=3e-2, rtol=3e-2)

    print("KERNEL_OK")
</pallas_src>

<mosaic_0001>
module attributes {stable_mosaic.version = 11 : i64} {
  func.func @_koopman_kernel_fused(%arg0: i32, %arg1: memref<152x128xf32, #tpu.memory_space<vmem>>, %arg2: memref<128x128xf32, #tpu.memory_space<vmem>>, %arg3: memref<128x128xf32, #tpu.memory_space<vmem>>, %arg4: memref<128x128xf32, #tpu.memory_space<vmem>>, %arg5: memref<128x128xf32, #tpu.memory_space<vmem>>, %arg6: memref<8x128xf32, #tpu.memory_space<vmem>>, %arg7: memref<256x128xf32, #tpu.memory_space<vmem>>, %arg8: memref<152x128xf32, #tpu.memory_space<vmem>>, %arg9: memref<152x128xf32, #tpu.memory_space<vmem>>, %arg10: memref<152x256xf32, #tpu.memory_space<vmem>>) attributes {dimension_semantics = [#tpu.dimension_semantics<parallel>], iteration_bounds = array<i64: 2>, scalar_prefetch = 0 : i64, scratch_operands = 1 : i64, tpu.core_type = #tpu.core_type<tc>, window_params = [{transform_indices = @transform_0, window_bounds = array<i64: 152, 128>}, {pipeline_mode = #tpu.pipeline_mode<synchronous>, transform_indices = @transform_1, window_bounds = array<i64: 128, 128>}, {pipeline_mode = #tpu.pipeline_mode<synchronous>, transform_indices = @transform_2, window_bounds = array<i64: 128, 128>}, {pipeline_mode = #tpu.pipeline_mode<synchronous>, transform_indices = @transform_3, window_bounds = array<i64: 128, 128>}, {pipeline_mode = #tpu.pipeline_mode<synchronous>, transform_indices = @transform_4, window_bounds = array<i64: 128, 128>}, {pipeline_mode = #tpu.pipeline_mode<synchronous>, transform_indices = @transform_5, window_bounds = array<i64: 8, 128>}, {pipeline_mode = #tpu.pipeline_mode<synchronous>, transform_indices = @transform_6, window_bounds = array<i64: 256, 128>}, {transform_indices = @transform_7, window_bounds = array<i64: 152, 128>}, {transform_indices = @transform_8, window_bounds = array<i64: 152, 128>}]} {
    %c0 = arith.constant 0 : index
    %c0_0 = arith.constant 0 : index
    %0 = vector.load %arg1[%c0, %c0_0] : memref<152x128xf32, #tpu.memory_space<vmem>>, vector<152x128xf32>
    %c0_1 = arith.constant 0 : index
    %c0_2 = arith.constant 0 : index
    %1 = vector.load %arg2[%c0_1, %c0_2] : memref<128x128xf32, #tpu.memory_space<vmem>>, vector<128x128xf32>
    %cst = arith.constant dense<0.000000e+00> : vector<152x128xf32>
    %2 = tpu.matmul %0, %1, %cst {dimension_numbers = #tpu.dot_dimension_numbers<[1], [0], [0], [1], [0, 0, 1, 1], [], []>} : vector<152x128xf32>, vector<128x128xf32>, vector<152x128xf32> -> vector<152x128xf32>
    %c0_3 = arith.constant 0 : index
    %c0_4 = arith.constant 0 : index
    %3 = vector.load %arg6[%c0_3, %c0_4] : memref<8x128xf32, #tpu.memory_space<vmem>>, vector<1x128xf32>
    %4 = vector.broadcast %3 : vector<1x128xf32> to vector<152x128xf32>
    %5 = arith.addf %2, %4 : vector<152x128xf32>
    %6 = math.tanh %5 : vector<152x128xf32>
    %c0_5 = arith.constant 0 : index
    %c0_6 = arith.constant 0 : index
    %7 = vector.load %arg3[%c0_5, %c0_6] : memref<128x128xf32, #tpu.memory_space<vmem>>, vector<128x128xf32>
    %cst_7 = arith.constant dense<0.000000e+00> : vector<152x128xf32>
    %8 = tpu.matmul %6, %7, %cst_7 {dimension_numbers = #tpu.dot_dimension_numbers<[1], [0], [0], [1], [0, 0, 1, 1], [], []>} : vector<152x128xf32>, vector<128x128xf32>, vector<152x128xf32> -> vector<152x128xf32>
    %c1 = arith.constant 1 : index
    %c0_8 = arith.constant 0 : index
    %9 = vector.load %arg6[%c1, %c0_8] : memref<8x128xf32, #tpu.memory_space<vmem>>, vector<1x128xf32>
    %10 = vector.broadcast %9 : vector<1x128xf32> to vector<152x128xf32>
    %11 = arith.addf %8, %10 : vector<152x128xf32>
    %12 = math.tanh %11 : vector<152x128xf32>
    %c0_9 = arith.constant 0 : index
    %c0_10 = arith.constant 0 : index
    %13 = vector.load %arg4[%c0_9, %c0_10] : memref<128x128xf32, #tpu.memory_space<vmem>>, vector<128x128xf32>
    %cst_11 = arith.constant dense<0.000000e+00> : vector<152x128xf32>
    %14 = tpu.matmul %12, %13, %cst_11 {dimension_numbers = #tpu.dot_dimension_numbers<[1], [0], [0], [1], [0, 0, 1, 1], [], []>} : vector<152x128xf32>, vector<128x128xf32>, vector<152x128xf32> -> vector<152x128xf32>
    %c2 = arith.constant 2 : index
    %c0_12 = arith.constant 0 : index
    %15 = vector.load %arg6[%c2, %c0_12] : memref<8x128xf32, #tpu.memory_space<vmem>>, vector<1x128xf32>
    %16 = vector.broadcast %15 : vector<1x128xf32> to vector<152x128xf32>
    %17 = arith.addf %14, %16 : vector<152x128xf32>
    %18 = math.tanh %17 : vector<152x128xf32>
    %c0_13 = arith.constant 0 : index
    %c0_14 = arith.constant 0 : index
    %19 = vector.load %arg5[%c0_13, %c0_14] : memref<128x128xf32, #tpu.memory_space<vmem>>, vector<128x128xf32>
    %cst_15 = arith.constant dense<0.000000e+00> : vector<152x128xf32>
    %20 = tpu.matmul %18, %19, %cst_15 {dimension_numbers = #tpu.dot_dimension_numbers<[1], [0], [0], [1], [0, 0, 1, 1], [], []>} : vector<152x128xf32>, vector<128x128xf32>, vector<152x128xf32> -> vector<152x128xf32>
    %c3 = arith.constant 3 : index
    %c0_16 = arith.constant 0 : index
    %21 = vector.load %arg6[%c3, %c0_16] : memref<8x128xf32, #tpu.memory_space<vmem>>, vector<1x128xf32>
    %22 = vector.broadcast %21 : vector<1x128xf32> to vector<152x128xf32>
    %23 = arith.addf %20, %22 : vector<152x128xf32>
    %24 = math.tanh %23 : vector<152x128xf32>
    %c0_17 = arith.constant 0 : index
    %c0_18 = arith.constant 0 : index
    %25 = vector.load %arg8[%c0_17, %c0_18] : memref<152x128xf32, #tpu.memory_space<vmem>>, vector<152x128xf32>
    tpu.vector_store %arg8[%c0_17, %c0_18], %24 {strides = array<i32>} : memref<152x128xf32, #tpu.memory_space<vmem>>, vector<152x128xf32>,
    %c0_19 = arith.constant 0 : index
    %c0_20 = arith.constant 0 : index
    %26 = vector.load %arg10[%c0_19, %c0_20] : memref<152x256xf32, #tpu.memory_space<vmem>>, vector<152x128xf32>
    tpu.vector_store %arg10[%c0_19, %c0_20], %0 {strides = array<i32>} : memref<152x256xf32, #tpu.memory_space<vmem>>, vector<152x128xf32>,
    %c0_21 = arith.constant 0 : index
    %c128 = arith.constant 128 : index
    %27 = vector.load %arg10[%c0_21, %c128] : memref<152x256xf32, #tpu.memory_space<vmem>>, vector<152x128xf32>
    tpu.vector_store %arg10[%c0_21, %c128], %24 {strides = array<i32>} : memref<152x256xf32, #tpu.memory_space<vmem>>, vector<152x128xf32>,
    %c0_22 = arith.constant 0 : index
    %c0_23 = arith.constant 0 : index
    %28 = vector.load %arg10[%c0_22, %c0_23] : memref<152x256xf32, #tpu.memory_space<vmem>>, vector<152x256xf32>
    %c0_24 = arith.constant 0 : index
    %c0_25 = arith.constant 0 : index
    %29 = vector.load %arg7[%c0_24, %c0_25] : memref<256x128xf32, #tpu.memory_space<vmem>>, vector<256x128xf32>
    %cst_26 = arith.constant dense<0.000000e+00> : vector<152x128xf32>
    %30 = tpu.matmul %28, %29, %cst_26 {dimension_numbers = #tpu.dot_dimension_numbers<[1], [0], [0], [1], [0, 0, 1, 1], [], []>} : vector<152x256xf32>, vector<256x128xf32>, vector<152x128xf32> -> vector<152x128xf32>
    %c0_27 = arith.constant 0 : index
    %c0_28 = arith.constant 0 : index
    %31 = vector.load %arg9[%c0_27, %c0_28] : memref<152x128xf32, #tpu.memory_space<vmem>>, vector<152x128xf32>
    tpu.vector_store %arg9[%c0_27, %c0_28], %30 {strides = array<i32>} : memref<152x128xf32, #tpu.memory_space<vmem>>, vector<152x128xf32>,
    return
  }
  func.func @transform_0(%arg0: i32) -> (i32, i32) {
    %c0_i32 = arith.constant 0 : i32
    %c0_i32_0 = arith.constant 0 : i32
    return %arg0, %c0_i32 : i32, i32
  }
  func.func @transform_1(%arg0: i32) -> (i32, i32) {
    %c0_i32 = arith.constant 0 : i32
    %c0_i32_0 = arith.constant 0 : i32
    %c0_i32_1 = arith.constant 0 : i32
    return %c0_i32, %c0_i32_0 : i32, i32
  }
  func.func @transform_2(%arg0: i32) -> (i32, i32) {
    %c0_i32 = arith.constant 0 : i32
    %c0_i32_0 = arith.constant 0 : i32
    %c0_i32_1 = arith.constant 0 : i32
    return %c0_i32, %c0_i32_0 : i32, i32
  }
  func.func @transform_3(%arg0: i32) -> (i32, i32) {
    %c0_i32 = arith.constant 0 : i32
    %c0_i32_0 = arith.constant 0 : i32
    %c0_i32_1 = arith.constant 0 : i32
    return %c0_i32, %c0_i32_0 : i32, i32
  }
  func.func @transform_4(%arg0: i32) -> (i32, i32) {
    %c0_i32 = arith.constant 0 : i32
    %c0_i32_0 = arith.constant 0 : i32
    %c0_i32_1 = arith.constant 0 : i32
    return %c0_i32, %c0_i32_0 : i32, i32
  }
  func.func @transform_5(%arg0: i32) -> (i32, i32) {
    %c0_i32 = arith.constant 0 : i32
    %c0_i32_0 = arith.constant 0 : i32
    %c0_i32_1 = arith.constant 0 : i32
    return %c0_i32, %c0_i32_0 : i32, i32
  }
  func.func @transform_6(%arg0: i32) -> (i32, i32) {
    %c0_i32 = arith.constant 0 : i32
    %c0_i32_0 = arith.constant 0 : i32
    %c0_i32_1 = arith.constant 0 : i32
    return %c0_i32, %c0_i32_0 : i32, i32
  }
  func.func @transform_7(%arg0: i32) -> (i32, i32) {
    %c0_i32 = arith.constant 0 : i32
    %c0_i32_0 = arith.constant 0 : i32
    return %arg0, %c0_i32 : i32, i32
  }
  func.func @transform_8(%arg0: i32) -> (i32, i32) {
    %c0_i32 = arith.constant 0 : i32
    %c0_i32_0 = arith.constant 0 : i32
    return %arg0, %c0_i32 : i32, i32
  }
}

</mosaic_0001>

<llo_original>
// kernel: tpu_custom_call.1
$region0: #{tpu_custom_call.1}
  #allocation0 [shape = 'u32[]', space=smem, size = 0x4, offset = 0x4, fixed_abs, tag = 'smem constant byte address 0x4 - core index']
  #allocation1 [shape = 'u32[144,128]{1,0:T(1,128)}', space=vmem, size = 0x12000, scoped, tag = 'internal scratch']
  #allocation2 [shape = 'f32[152,256]{1,0:T(8,128)}', space=vmem, size = 0x26000, scoped, tag = 'scratch operand']
  %s0 = inlined_call_operand.hbm [shape: f32[304,128], index: 0, kind: input, shape index: {}]
  %s1 = inlined_call_operand.hbm [shape: f32[128,128], index: 1, kind: input, shape index: {}]
  %s2 = inlined_call_operand.hbm [shape: f32[128,128], index: 2, kind: input, shape index: {}]
  %s3 = inlined_call_operand.hbm [shape: f32[128,128], index: 3, kind: input, shape index: {}]
  %s4 = inlined_call_operand.hbm [shape: f32[128,128], index: 4, kind: input, shape index: {}]
  %s5 = inlined_call_operand.hbm [shape: f32[8,128], index: 5, kind: input, shape index: {}]
  %s6 = inlined_call_operand.hbm [shape: f32[256,128], index: 6, kind: input, shape index: {}]
  %s7 = inlined_call_operand.hbm [shape: f32[304,128], index: 7, kind: output, shape index: {0}]
  %s8 = inlined_call_operand.hbm [shape: f32[304,128], index: 8, kind: output, shape index: {1}]
  %9 = xla_tuple %s7, %s8
  %s10 = sld [smem:[#allocation0]]
  $region97: #{tpu_custom_call.1} parent=0
    _
  %s12 = ssub.s32 1, %s10
  %s13 = scalar_select 0, %s12, %s10
  $region1: #{tpu_custom_call.1} parent=0
    #allocation3 [shape = 'u8[155648]{0}', space=vmem, size = 0x26000, scoped, tag = 'input window, operand 0']
    #allocation4 [shape = 's32[2]{0}', space=sflag, size = 0x8, scoped, tag = 'scoped memory for tpu_custom_call.1']
    #allocation5 [shape = 's32[2]{0}', space=sflag, size = 0x8, scoped, tag = 'scoped memory for tpu_custom_call.1']
    #allocation6 [shape = 'u8[65536]{0}', space=vmem, size = 0x10000, scoped, tag = 'input window, operand 1, single buffered']
    #allocation7 [shape = 's32[1]{0}', space=sflag, size = 0x4, scoped, tag = 'scoped memory for tpu_custom_call.1']
    #allocation8 [shape = 'u8[65536]{0}', space=vmem, size = 0x10000, scoped, tag = 'input window, operand 2, single buffered']
    #allocation9 [shape = 'u8[65536]{0}', space=vmem, size = 0x10000, scoped, tag = 'input window, operand 3, single buffered']
    #allocation10 [shape = 's32[1]{0}', space=sflag, size = 0x4, scoped, tag = 'scoped memory for tpu_custom_call.1']
    #allocation11 [shape = 'u8[65536]{0}', space=vmem, size = 0x10000, scoped, tag = 'input window, operand 4, single buffered']
    #allocation12 [shape = 'u8[4096]{0}', space=vmem, size = 0x1000, scoped, tag = 'input window, operand 5, single buffered']
    #allocation13 [shape = 's32[1]{0}', space=sflag, size = 0x4, scoped, tag = 'scoped memory for tpu_custom_call.1']
    #allocation14 [shape = 'u8[131072]{0}', space=vmem, size = 0x20000, scoped, tag = 'input window, operand 6, single buffered']
    #allocation15 [shape = 'u8[155648]{0}', space=vmem, size = 0x26000, scoped, tag = 'output window, operand 0']
    #allocation16 [shape = 'u8[155648]{0}', space=vmem, size = 0x26000, scoped, tag = 'output window, operand 1']
    #allocation17 [shape = 's32[2]{0}', space=sflag, size = 0x8, scoped, tag = 'scoped memory for tpu_custom_call.1']
    %14 = vsyncpa [#allocation4], 0
    %s15 = scalar_lea.sflag [#allocation4], 1
    %16 = vsyncpa %s15, 0
    %17 = vsyncpa [#allocation7], 0
    %18 = vsyncpa [#allocation10], 0
    %19 = vsyncpa [#allocation13], 0
    %20 = vsyncpa [#allocation5], 0
    %s21 = scalar_lea.sflag [#allocation5], 1
    %22 = vsyncpa %s21, 0
    %23 = vsyncpa [#allocation17], 0
    %s24 = scalar_lea.sflag [#allocation17], 1
    %25 = vsyncpa %s24, 0
    loop: start=0, step=1, limit=4
    $region2: #{tpu_custom_call.1} parent=1 // loop_pre_header
      _
    $region3: #{tpu_custom_call.1} parent=1 // loop_header
      %s27 = sphi 0, %s31
      %p28 = scmp.ge.s32.totalorder %s27, 4
      %s37 = sphi 0, %s39
      %s40 = sphi 0, %s37
      %s41 = sphi 0, %s40
      %s57 = sphi 0, %s41
      %s61 = sphi 0, %s61
      %s63 = sphi 0, %s61
      %s64 = sphi 0, %s63
      %s78 = sphi 0, %s64
      %s82 = sphi 0, %s82
      %s84 = sphi 0, %s82
      %s85 = sphi 0, %s84
      %s99 = sphi 0, %s85
      %s103 = sphi 0, %s103
      %s105 = sphi 0, %s103
      %s106 = sphi 0, %s105
      %s120 = sphi 0, %s106
      %s124 = sphi 0, %s124
      %s126 = sphi 0, %s124
      %s127 = sphi 0, %s126
      %s141 = sphi 0, %s127
      %s145 = sphi 0, %s145
      %s147 = sphi 0, %s145
      %s148 = sphi 0, %s147
      %s162 = sphi 0, %s148
      %s166 = sphi 0, %s166
      %s168 = sphi 0, %s166
      %s169 = sphi 0, %s168
      %s183 = sphi 0, %s169
      %s189 = sphi 0, %s191
      %s192 = sphi 0, %s189
      %s193 = sphi 0, %s192
      %s209 = sphi 0, %s193
      %s215 = sphi 0, %s217
      %s218 = sphi 0, %s215
      %s219 = sphi 0, %s218
      %s235 = sphi 0, %s219
    $region4: #{tpu_custom_call.1} parent=1 // loop_header_branch
      %30 = sbr.rel (%p28) target = $region8
    $region5: #{tpu_custom_call.1} parent=1 // loop_body
      %s32 = ssub.s32 %s27, 1
      %s33 = ssub.s32 %s27, 2
      %s34 = sadd.s32 %s27, 1
      %s35 = ssub.s32 %s27, %s34
      %p36 = scmp.eq.s32.totalorder %s35, 0
      %s38 = sadd.s32 %s37, 1
      %s39 = scalar_select %p36, %s37, %s38
      %p42 = pneg %p36
      %p43 = scmp.eq.s32.totalorder %s27, 1
      %p44 = por %p42, %p43
      %p45 = scmp.ne.s32.totalorder %s37, %s40
      %p46 = scmp.eq.s32.totalorder %s27, 0
      %p47 = por %p45, %p46
      %p48 = scmp.ne.s32.totalorder %s37, %s40
      %p49 = scmp.eq.s32.totalorder %s32, 1
      %p50 = por %p48, %p49
      %p51 = scmp.ne.s32.totalorder %s40, %s41
      %p52 = scmp.eq.s32.totalorder %s32, 0
      %p53 = por %p51, %p52
      %p54 = scmp.ne.s32.totalorder %s40, %s41
      %p55 = scmp.eq.s32.totalorder %s33, 1
      %p56 = por %p54, %p55
      %p58 = scmp.ne.s32.totalorder %s41, %s57
      %p59 = scmp.eq.s32.totalorder %s33, 0
      %p60 = por %p58, %p59
      %s62 = sadd.s32 %s61, 1
      %p65 = scmp.eq.s32.totalorder %s27, 1
      %p66 = scmp.ne.s32.totalorder %s61, %s63
      %p67 = scmp.eq.s32.totalorder %s27, 0
      %p68 = por %p66, %p67
      %p69 = scmp.ne.s32.totalorder %s61, %s63
      %p70 = scmp.eq.s32.totalorder %s32, 1
      %p71 = por %p69, %p70
      %p72 = scmp.ne.s32.totalorder %s63, %s64
      %p73 = scmp.eq.s32.totalorder %s32, 0
      %p74 = por %p72, %p73
      %p75 = scmp.ne.s32.totalorder %s63, %s64
      %p76 = scmp.eq.s32.totalorder %s33, 1
      %p77 = por %p75, %p76
      %p79 = scmp.ne.s32.totalorder %s64, %s78
      %p80 = scmp.eq.s32.totalorder %s33, 0
      %p81 = por %p79, %p80
      %s83 = sadd.s32 %s82, 1
      %p86 = scmp.eq.s32.totalorder %s27, 1
      %p87 = scmp.ne.s32.totalorder %s82, %s84
      %p88 = scmp.eq.s32.totalorder %s27, 0
      %p89 = por %p87, %p88
      %p90 = scmp.ne.s32.totalorder %s82, %s84
      %p91 = scmp.eq.s32.totalorder %s32, 1
      %p92 = por %p90, %p91
      %p93 = scmp.ne.s32.totalorder %s84, %s85
      %p94 = scmp.eq.s32.totalorder %s32, 0
      %p95 = por %p93, %p94
      %p96 = scmp.ne.s32.totalorder %s84, %s85
      %p97 = scmp.eq.s32.totalorder %s33, 1
      %p98 = por %p96, %p97
      %p100 = scmp.ne.s32.totalorder %s85, %s99
      %p101 = scmp.eq.s32.totalorder %s33, 0
      %p102 = por %p100, %p101
      %s104 = sadd.s32 %s103, 1
      %p107 = scmp.eq.s32.totalorder %s27, 1
      %p108 = scmp.ne.s32.totalorder %s103, %s105
      %p109 = scmp.eq.s32.totalorder %s27, 0
      %p110 = por %p108, %p109
      %p111 = scmp.ne.s32.totalorder %s103, %s105
      %p112 = scmp.eq.s32.totalorder %s32, 1
      %p113 = por %p111, %p112
      %p114 = scmp.ne.s32.totalorder %s105, %s106
      %p115 = scmp.eq.s32.totalorder %s32, 0
      %p116 = por %p114, %p115
      %p117 = scmp.ne.s32.totalorder %s105, %s106
      %p118 = scmp.eq.s32.totalorder %s33, 1
      %p119 = por %p117, %p118
      %p121 = scmp.ne.s32.totalorder %s106, %s120
      %p122 = scmp.eq.s32.totalorder %s33, 0
      %p123 = por %p121, %p122
      %s125 = sadd.s32 %s124, 1
      %p128 = scmp.eq.s32.totalorder %s27, 1
      %p129 = scmp.ne.s32.totalorder %s124, %s126
      %p130 = scmp.eq.s32.totalorder %s27, 0
      %p131 = por %p129, %p130
      %p132 = scmp.ne.s32.totalorder %s124, %s126
      %p133 = scmp.eq.s32.totalorder %s32, 1
      %p134 = por %p132, %p133
      %p135 = scmp.ne.s32.totalorder %s126, %s127
      %p136 = scmp.eq.s32.totalorder %s32, 0
      %p137 = por %p135, %p136
      %p138 = scmp.ne.s32.totalorder %s126, %s127
      %p139 = scmp.eq.s32.totalorder %s33, 1
      %p140 = por %p138, %p139
      %p142 = scmp.ne.s32.totalorder %s127, %s141
      %p143 = scmp.eq.s32.totalorder %s33, 0
      %p144 = por %p142, %p143
      %s146 = sadd.s32 %s145, 1
      %p149 = scmp.eq.s32.totalorder %s27, 1
      %p150 = scmp.ne.s32.totalorder %s145, %s147
      %p151 = scmp.eq.s32.totalorder %s27, 0
      %p152 = por %p150, %p151
      %p153 = scmp.ne.s32.totalorder %s145, %s147
      %p154 = scmp.eq.s32.totalorder %s32, 1
      %p155 = por %p153, %p154
      %p156 = scmp.ne.s32.totalorder %s147, %s148
      %p157 = scmp.eq.s32.totalorder %s32, 0
      %p158 = por %p156, %p157
      %p159 = scmp.ne.s32.totalorder %s147, %s148
      %p160 = scmp.eq.s32.totalorder %s33, 1
      %p161 = por %p159, %p160
      %p163 = scmp.ne.s32.totalorder %s148, %s162
      %p164 = scmp.eq.s32.totalorder %s33, 0
      %p165 = por %p163, %p164
      %s167 = sadd.s32 %s166, 1
      %p170 = scmp.eq.s32.totalorder %s27, 1
      %p171 = scmp.ne.s32.totalorder %s166, %s168
      %p172 = scmp.eq.s32.totalorder %s27, 0
      %p173 = por %p171, %p172
      %p174 = scmp.ne.s32.totalorder %s166, %s168
      %p175 = scmp.eq.s32.totalorder %s32, 1
      %p176 = por %p174, %p175
      %p177 = scmp.ne.s32.totalorder %s168, %s169
      %p178 = scmp.eq.s32.totalorder %s32, 0
      %p179 = por %p177, %p178
      %p180 = scmp.ne.s32.totalorder %s168, %s169
      %p181 = scmp.eq.s32.totalorder %s33, 1
      %p182 = por %p180, %p181
      %p184 = scmp.ne.s32.totalorder %s169, %s183
      %p185 = scmp.eq.s32.totalorder %s33, 0
      %p186 = por %p184, %p185
      %s187 = ssub.s32 %s27, %s34
      %p188 = scmp.eq.s32.totalorder %s187, 0
      %s190 = sadd.s32 %s189, 1
      %s191 = scalar_select %p188, %s189, %s190
      %p194 = pneg %p188
      %p195 = scmp.eq.s32.totalorder %s27, 1
      %p196 = por %p194, %p195
      %p197 = scmp.ne.s32.totalorder %s189, %s192
      %p198 = scmp.eq.s32.totalorder %s27, 0
      %p199 = por %p197, %p198
      %p200 = scmp.ne.s32.totalorder %s189, %s192
      %p201 = scmp.eq.s32.totalorder %s32, 1
      %p202 = por %p200, %p201
      %p203 = scmp.ne.s32.totalorder %s192, %s193
      %p204 = scmp.eq.s32.totalorder %s32, 0
      %p205 = por %p203, %p204
      %p206 = scmp.ne.s32.totalorder %s192, %s193
      %p207 = scmp.eq.s32.totalorder %s33, 1
      %p208 = por %p206, %p207
      %p210 = scmp.ne.s32.totalorder %s193, %s209
      %p211 = scmp.eq.s32.totalorder %s33, 0
      %p212 = por %p210, %p211
      %s213 = ssub.s32 %s27, %s34
      %p214 = scmp.eq.s32.totalorder %s213, 0
      %s216 = sadd.s32 %s215, 1
      %s217 = scalar_select %p214, %s215, %s216
      %p220 = pneg %p214
      %p221 = scmp.eq.s32.totalorder %s27, 1
      %p222 = por %p220, %p221
      %p223 = scmp.ne.s32.totalorder %s215, %s218
      %p224 = scmp.eq.s32.totalorder %s27, 0
      %p225 = por %p223, %p224
      %p226 = scmp.ne.s32.totalorder %s215, %s218
      %p227 = scmp.eq.s32.totalorder %s32, 1
      %p228 = por %p226, %p227
      %p229 = scmp.ne.s32.totalorder %s218, %s219
      %p230 = scmp.eq.s32.totalorder %s32, 0
      %p231 = por %p229, %p230
      %p232 = scmp.ne.s32.totalorder %s218, %s219
      %p233 = scmp.eq.s32.totalorder %s33, 1
      %p234 = por %p232, %p233
      %p236 = scmp.ne.s32.totalorder %s219, %s235
      %p237 = scmp.eq.s32.totalorder %s33, 0
      %p238 = por %p236, %p237
      %p239 = scmp.le.s32.totalorder 1, %s27
      %p240 = scmp.lt.s32.totalorder %s27, 3
      %p241 = pnand %p239, %p240
      %p242 = pneg %p241
      // Predicated region
      $region9: #{tpu_custom_call.1} parent=5 // pred_check
        _
      $region10: #{tpu_custom_call.1} parent=5 // pred_check_branch
        %244 = sbr.rel (%p241) target = $region12
      $region11: #{tpu_custom_call.1} parent=5 // pred_region
        %s245 = ssub.s32 %s27, 1
        // Predicated region
        $region13: #{tpu_custom_call.1} parent=11 // pred_check
          %p246 = pneg %p74
        $region14: #{tpu_custom_call.1} parent=11 // pred_check_branch
          %248 = sbr.rel (%p246) target = $region16
        $region15: #{tpu_custom_call.1} parent=11 // pred_region
          %s250 = ssub.s32 2048, 2048
          %251 = vsyncadd [#allocation7], %s250
          %s252 = sshll.u32 [#allocation6], 4
          %s253 = int_to_ptr.vmem [resolvable:$true] %s252
          %258 = dma.hbm_to_vmem [thread:$0]  %s1, 2048, %s253, [#allocation7], 128, 128, 8
        $region16: #{tpu_custom_call.1} parent=11 // pred_fallthru
          _
        // Predicated region
        $region17: #{tpu_custom_call.1} parent=11 // pred_check
          %p259 = pneg %p95
        $region18: #{tpu_custom_call.1} parent=11 // pred_check_branch
          %261 = sbr.rel (%p259) target = $region20
        $region19: #{tpu_custom_call.1} parent=11 // pred_region
          %s263 = ssub.s32 2048, 2048
          %264 = vsyncadd [#allocation7], %s263
          %s265 = sshll.u32 [#allocation8], 4
          %s266 = int_to_ptr.vmem [resolvable:$true] %s265
          %271 = dma.hbm_to_vmem [thread:$0]  %s2, 2048, %s266, [#allocation7], 128, 128, 8
        $region20: #{tpu_custom_call.1} parent=11 // pred_fallthru
          _
        // Predicated region
        $region21: #{tpu_custom_call.1} parent=11 // pred_check
          %p272 = pneg %p116
        $region22: #{tpu_custom_call.1} parent=11 // pred_check_branch
          %274 = sbr.rel (%p272) target = $region24
        $region23: #{tpu_custom_call.1} parent=11 // pred_region
          %s276 = ssub.s32 2048, 2048
          %277 = vsyncadd [#allocation10], %s276
          %s278 = sshll.u32 [#allocation9], 4
          %s279 = int_to_ptr.vmem [resolvable:$true] %s278
          %284 = dma.hbm_to_vmem [thread:$0]  %s3, 2048, %s279, [#allocation10], 128, 128, 8
        $region24: #{tpu_custom_call.1} parent=11 // pred_fallthru
          _
        // Predicated region
        $region25: #{tpu_custom_call.1} parent=11 // pred_check
          %p285 = pneg %p137
        $region26: #{tpu_custom_call.1} parent=11 // pred_check_branch
          %287 = sbr.rel (%p285) target = $region28
        $region27: #{tpu_custom_call.1} parent=11 // pred_region
          %s289 = ssub.s32 2048, 2048
          %290 = vsyncadd [#allocation10], %s289
          %s291 = sshll.u32 [#allocation11], 4
          %s292 = int_to_ptr.vmem [resolvable:$true] %s291
          %297 = dma.hbm_to_vmem [thread:$0]  %s4, 2048, %s292, [#allocation10], 128, 128, 8
        $region28: #{tpu_custom_call.1} parent=11 // pred_fallthru
          _
        // Predicated region
        $region29: #{tpu_custom_call.1} parent=11 // pred_check
          %p298 = pneg %p158
        $region30: #{tpu_custom_call.1} parent=11 // pred_check_branch
          %300 = sbr.rel (%p298) target = $region32
        $region31: #{tpu_custom_call.1} parent=11 // pred_region
          %s302 = ssub.s32 128, 128
          %303 = vsyncadd [#allocation13], %s302
          %s305 = sshll.u32 [#allocation12], 4
          %s306 = int_to_ptr.vmem [resolvable:$true] %s305
          %308 = dma.hbm_to_vmem [thread:$0]  %s5, 128, %s306, [#allocation13]
        $region32: #{tpu_custom_call.1} parent=11 // pred_fallthru
          _
        // Predicated region
        $region33: #{tpu_custom_call.1} parent=11 // pred_check
          %p309 = pneg %p179
        $region34: #{tpu_custom_call.1} parent=11 // pred_check_branch
          %311 = sbr.rel (%p309) target = $region36
        $region35: #{tpu_custom_call.1} parent=11 // pred_region
          %s313 = ssub.s32 4096, 4096
          %314 = vsyncadd [#allocation13], %s313
          %s315 = sshll.u32 [#allocation14], 4
          %s316 = int_to_ptr.vmem [resolvable:$true] %s315
          %321 = dma.hbm_to_vmem [thread:$0]  %s6, 4096, %s316, [#allocation13], 128, 128, 8
        $region36: #{tpu_custom_call.1} parent=11 // pred_fallthru
          _
      $region12: #{tpu_custom_call.1} parent=5 // pred_fallthru
        _
      %p322 = scmp.lt.s32.totalorder %s27, 2
      // Predicated region
      $region37: #{tpu_custom_call.1} parent=5 // pred_check
        %p323 = pneg %p322
      $region38: #{tpu_custom_call.1} parent=5 // pred_check_branch
        %325 = sbr.rel (%p323) target = $region40
      $region39: #{tpu_custom_call.1} parent=5 // pred_region
        // Predicated region
        $region41: #{tpu_custom_call.1} parent=39 // pred_check
          %p326 = pneg %p47
        $region42: #{tpu_custom_call.1} parent=39 // pred_check_branch
          %328 = sbr.rel (%p326) target = $region44
        $region43: #{tpu_custom_call.1} parent=39 // pred_region
          %s329 = sand.u32 %s37, 1
          %s330 = scalar_lea.sflag [#allocation4], %s329
          %s331 = sand.u32 %s37, 1
          %s332 = smul.addr %s331, 152
          %s333 = scalar_lea.vmem [#allocation3], %s332
          %s334 = smul.u32 19, %s27
          %s336 = ssub.s32 2432, 2432
          %337 = vsyncadd %s330, %s336
          %s338 = smul.addr %s334, 128
          %s339 = scalar_lea.hbm %s0, %s338
          %s340 = sshll.u32 %s333, 4
          %s341 = int_to_ptr.vmem [resolvable:$true] %s340
          %346 = dma.hbm_to_vmem [thread:$0]  %s339, 2432, %s341, %s330, 128, 128, 8
        $region44: #{tpu_custom_call.1} parent=39 // pred_fallthru
          _
      $region40: #{tpu_custom_call.1} parent=5 // pred_fallthru
        _
      %p347 = scmp.le.s32.totalorder 1, %s27
      %p348 = scmp.lt.s32.totalorder %s27, 3
      %p349 = pnand %p347, %p348
      %p350 = pneg %p349
      // Predicated region
      $region45: #{tpu_custom_call.1} parent=5 // pred_check
        _
      $region46: #{tpu_custom_call.1} parent=5 // pred_check_branch
        %352 = sbr.rel (%p349) target = $region48
      $region47: #{tpu_custom_call.1} parent=5 // pred_region
        %s353 = ssub.s32 %s27, 1
        %s354 = sand.u32 %s40, 1
        %s355 = scalar_lea.sflag [#allocation4], %s354
        %s356 = sand.u32 %s40, 1
        %s357 = smul.addr %s356, 152
        %s358 = scalar_lea.vmem [#allocation3], %s357
        // Predicated region
        $region49: #{tpu_custom_call.1} parent=47 // pred_check
          %p359 = pneg %p53
        $region50: #{tpu_custom_call.1} parent=47 // pred_check_branch
          %361 = sbr.rel (%p359) target = $region52
        $region51: #{tpu_custom_call.1} parent=47 // pred_region
          %362 = dma.done %s355, 2432
        $region52: #{tpu_custom_call.1} parent=47 // pred_fallthru
          _
        // Predicated region
        $region53: #{tpu_custom_call.1} parent=47 // pred_check
          %p363 = pneg %p74
        $region54: #{tpu_custom_call.1} parent=47 // pred_check_branch
          %365 = sbr.rel (%p363) target = $region56
        $region55: #{tpu_custom_call.1} parent=47 // pred_region
          %366 = dma.done [#allocation7], 2048
        $region56: #{tpu_custom_call.1} parent=47 // pred_fallthru
          _
        // Predicated region
        $region57: #{tpu_custom_call.1} parent=47 // pred_check
          %p367 = pneg %p95
        $region58: #{tpu_custom_call.1} parent=47 // pred_check_branch
          %369 = sbr.rel (%p367) target = $region60
        $region59: #{tpu_custom_call.1} parent=47 // pred_region
          %370 = dma.done [#allocation7], 2048
        $region60: #{tpu_custom_call.1} parent=47 // pred_fallthru
          _
        // Predicated region
        $region61: #{tpu_custom_call.1} parent=47 // pred_check
          %p371 = pneg %p116
        $region62: #{tpu_custom_call.1} parent=47 // pred_check_branch
          %373 = sbr.rel (%p371) target = $region64
        $region63: #{tpu_custom_call.1} parent=47 // pred_region
          %374 = dma.done [#allocation10], 2048
        $region64: #{tpu_custom_call.1} parent=47 // pred_fallthru
          _
        // Predicated region
        $region65: #{tpu_custom_call.1} parent=47 // pred_check
          %p375 = pneg %p137
        $region66: #{tpu_custom_call.1} parent=47 // pred_check_branch
          %377 = sbr.rel (%p375) target = $region68
        $region67: #{tpu_custom_call.1} parent=47 // pred_region
          %378 = dma.done [#allocation10], 2048
        $region68: #{tpu_custom_call.1} parent=47 // pred_fallthru
          _
        // Predicated region
        $region69: #{tpu_custom_call.1} parent=47 // pred_check
          %p379 = pneg %p158
        $region70: #{tpu_custom_call.1} parent=47 // pred_check_branch
          %381 = sbr.rel (%p379) target = $region72
        $region71: #{tpu_custom_call.1} parent=47 // pred_region
          %382 = dma.done [#allocation13], 128
        $region72: #{tpu_custom_call.1} parent=47 // pred_fallthru
          _
        // Predicated region
        $region73: #{tpu_custom_call.1} parent=47 // pred_check
          %p383 = pneg %p179
        $region74: #{tpu_custom_call.1} parent=47 // pred_check_branch
          %385 = sbr.rel (%p383) target = $region76
        $region75: #{tpu_custom_call.1} parent=47 // pred_region
          %386 = dma.done [#allocation13], 4096
        $region76: #{tpu_custom_call.1} parent=47 // pred_fallthru
          _
        %s387 = sand.u32 %s40, 1
        %s388 = scalar_lea.sflag [#allocation4], %s387
        %s389 = sand.u32 %s40, 1
        %s390 = smul.addr %s389, 152
        %s391 = scalar_lea.vmem [#allocation3], %s390
        %p392 = pneg %p53
        %p393 = pneg %p50
        %p394 = pneg %p74
        %p395 = pneg %p71
        %p396 = pneg %p95
        %p397 = pneg %p92
        %p398 = pneg %p116
        %p399 = pneg %p113
        %p400 = pneg %p137
        %p401 = pneg %p134
        %p402 = pneg %p158
        %p403 = pneg %p155
        %p404 = pneg %p179
        %p405 = pneg %p176
        %p406 = pneg %p205
        %p407 = pneg %p202
        %s408 = sand.u32 %s192, 1
        %s409 = scalar_lea.sflag [#allocation5], %s408
        %s410 = sand.u32 %s192, 1
        %s411 = smul.addr %s410, 152
        %s412 = scalar_lea.vmem [#allocation15], %s411
        %p413 = pneg %p231
        %p414 = pneg %p228
        %s415 = sand.u32 %s218, 1
        %s416 = scalar_lea.sflag [#allocation17], %s415
        %s417 = sand.u32 %s218, 1
        %s418 = smul.addr %s417, 152
        %s419 = scalar_lea.vmem [#allocation16], %s418
        %s420 = smul.u32 19, %s32
        %s421 = smul.u32 19, %s32
        %s422 = smul.u32 19, %s32
        %v423 = vld [vmem:[%s358] sm:$0xff]
        %v424 = vld [vmem:[%s358 + $0x8] sm:$0xff]
        %v425 = vld [vmem:[%s358 + $0x10] sm:$0xff]
        %v426 = vld [vmem:[%s358 + $0x18] sm:$0xff]
        %v427 = vld [vmem:[%s358 + $0x20] sm:$0xff]
        %v428 = vld [vmem:[%s358 + $0x28] sm:$0xff]
        %v429 = vld [vmem:[%s358 + $0x30] sm:$0xff]
        %v430 = vld [vmem:[%s358 + $0x38] sm:$0xff]
        %v431 = vld [vmem:[%s358 + $0x40] sm:$0xff]
        %v432 = vld [vmem:[%s358 + $0x48] sm:$0xff]
        %v433 = vld [vmem:[%s358 + $0x50] sm:$0xff]
        %v434 = vld [vmem:[%s358 + $0x58] sm:$0xff]
        %v435 = vld [vmem:[%s358 + $0x60] sm:$0xff]
        %v436 = vld [vmem:[%s358 + $0x68] sm:$0xff]
        %v437 = vld [vmem:[%s358 + $0x70] sm:$0xff]
        %v438 = vld [vmem:[%s358 + $0x78] sm:$0xff]
        %v439 = vld [vmem:[%s358 + $0x80] sm:$0xff]
        %v440 = vld [vmem:[%s358 + $0x88] sm:$0xff]
        %v441 = vld [vmem:[%s358 + $0x90] sm:$0xff]
        %v442 = vld [vmem:[#allocation6] sm:$0xff]
        %v443 = vld [vmem:[#allocation6 + $0x8] sm:$0xff]
        %v444 = vld [vmem:[#allocation6 + $0x10] sm:$0xff]
        %v445 = vld [vmem:[#allocation6 + $0x18] sm:$0xff]
        %v446 = vld [vmem:[#allocation6 + $0x20] sm:$0xff]
        %v447 = vld [vmem:[#allocation6 + $0x28] sm:$0xff]
        %v448 = vld [vmem:[#allocation6 + $0x30] sm:$0xff]
        %v449 = vld [vmem:[#allocation6 + $0x38] sm:$0xff]
        %v450 = vld [vmem:[#allocation6 + $0x40] sm:$0xff]
        %v451 = vld [vmem:[#allocation6 + $0x48] sm:$0xff]
        %v452 = vld [vmem:[#allocation6 + $0x50] sm:$0xff]
        %v453 = vld [vmem:[#allocation6 + $0x58] sm:$0xff]
        %v454 = vld [vmem:[#allocation6 + $0x60] sm:$0xff]
        %v455 = vld [vmem:[#allocation6 + $0x68] sm:$0xff]
        %v456 = vld [vmem:[#allocation6 + $0x70] sm:$0xff]
        %v457 = vld [vmem:[#allocation6 + $0x78] sm:$0xff]
        %v458 = vld [vmem:[#allocation12] sm:$0x1]
        %v459 = vlaneseq
        %v460 = vshrl.u32 %v459, 7
        %v461 = vsub.s32 0, %v460
        %v462 = vrot.slane %v458, %v461
        %463 = vmatprep.subr.mxu0 0.0
        %464 = vmatpush1.msra.mxu0 %v442
        %465 = vmatprep.subr.mxu0 0.0
        %466 = vmatpush1.msra.mxu0 %v443
        %467 = vmatprep.subr.mxu0 0.0
        %468 = vmatpush1.msra.mxu0 %v444
        %469 = vmatprep.subr.mxu0 0.0
        %470 = vmatpush1.msra.mxu0 %v445
        %471 = vmatprep.subr.mxu0 0.0
        %472 = vmatpush1.msra.mxu0 %v446
        %473 = vmatprep.subr.mxu0 0.0
        %474 = vmatpush1.msra.mxu0 %v447
        %475 = vmatprep.subr.mxu0 0.0
        %476 = vmatpush1.msra.mxu0 %v448
        %477 = vmatprep.subr.mxu0 0.0
        %478 = vmatpush1.msra.mxu0 %v449
        %479 = vmatprep.subr.mxu0 0.0
        %480 = vmatpush1.msra.mxu0 %v450
        %481 = vmatprep.subr.mxu0 0.0
        %482 = vmatpush1.msra.mxu0 %v451
        %483 = vmatprep.subr.mxu0 0.0
        %484 = vmatpush1.msra.mxu0 %v452
        %485 = vmatprep.subr.mxu0 0.0
        %486 = vmatpush1.msra.mxu0 %v453
        %487 = vmatprep.subr.mxu0 0.0
        %488 = vmatpush1.msra.mxu0 %v454
        %489 = vmatprep.subr.mxu0 0.0
        %490 = vmatpush1.msra.mxu0 %v455
        %491 = vmatprep.subr.mxu0 0.0
        %492 = vmatpush1.msra.mxu0 %v456
        %493 = vmatprep.subr.mxu0 0.0
        %494 = vmatpush1.msra.mxu0 %v457
        %495 = vmatprep.subr.mxu0 0.0
        %496 = vmatpush1.msra.mxu0 0.0
        %497 = vmatprep.subr.mxu0 0.0
        %498 = vmatpush1.msra.mxu0 0.0
        %499 = vmatprep.subr.mxu0 0.0
        %500 = vmatpush1.msra.mxu0 0.0
        %501 = vmatprep.subr.mxu0 0.0
        %502 = vmatpush1.msra.mxu0 0.0
        %503 = vmatprep.subr.mxu0 0.0
        %504 = vmatpush1.msra.mxu0 0.0
        %505 = vmatprep.subr.mxu0 0.0
        %506 = vmatpush1.msra.mxu0 0.0
        %507 = vmatprep.subr.mxu0 0.0
        %508 = vmatpush1.msra.mxu0 0.0
        %509 = vmatprep.subr.mxu0 0.0
        %510 = vmatpush1.msra.mxu0 0.0
        %511 = vmatprep.subr.mxu0 0.0
        %512 = vmatpush1.msra.mxu0 0.0
        %513 = vmatprep.subr.mxu0 0.0
        %514 = vmatpush1.msra.mxu0 0.0
        %515 = vmatprep.subr.mxu0 0.0
        %516 = vmatpush1.msra.mxu0 0.0
        %517 = vmatprep.subr.mxu0 0.0
        %518 = vmatpush1.msra.mxu0 0.0
        %519 = vmatprep.subr.mxu0 0.0
        %520 = vmatpush1.msra.mxu0 0.0
        %521 = vmatprep.subr.mxu0 0.0
        %522 = vmatpush1.msra.mxu0 0.0
        %523 = vmatprep.subr.mxu0 0.0
        %524 = vmatpush1.msra.mxu0 0.0
        %525 = vmatprep.subr.mxu0 0.0
        %526 = vmatpush1.msra.mxu0 0.0
        %527 = vmatprep.mubr.f32.mxu0 0.0
        %528 = vmatmul.mubr.f32.gmra.mrb[0].mxu0 %v423
        %v529 = vpop.f32.mrb[0].mxu0
        %v530 = vadd.f32 %v462, %v529
        %v531 = vpop.f32.mrb[0].mxu0
        %532 = vmatprep.mubr.f32.mxu0 0.0
        %533 = vmatmul.mubr.f32.gmra.mrb[0].mxu0 %v424
        %v534 = vpop.f32.mrb[0].mxu0
        %v535 = vadd.f32 %v462, %v534
        %v536 = vpop.f32.mrb[0].mxu0
        %537 = vmatprep.mubr.f32.mxu0 0.0
        %538 = vmatmul.mubr.f32.gmra.mrb[0].mxu0 %v425
        %v539 = vpop.f32.mrb[0].mxu0
        %v540 = vadd.f32 %v462, %v539
        %v541 = vpop.f32.mrb[0].mxu0
        %542 = vmatprep.mubr.f32.mxu0 0.0
        %543 = vmatmul.mubr.f32.gmra.mrb[0].mxu0 %v426
        %v544 = vpop.f32.mrb[0].mxu0
        %v545 = vadd.f32 %v462, %v544
        %v546 = vpop.f32.mrb[0].mxu0
        %547 = vmatprep.mubr.f32.mxu0 0.0
        %548 = vmatmul.mubr.f32.gmra.mrb[0].mxu0 %v427
        %v549 = vpop.f32.mrb[0].mxu0
        %v550 = vadd.f32 %v462, %v549
        %v551 = vpop.f32.mrb[0].mxu0
        %552 = vmatprep.mubr.f32.mxu0 0.0
        %553 = vmatmul.mubr.f32.gmra.mrb[0].mxu0 %v428
        %v554 = vpop.f32.mrb[0].mxu0
        %v555 = vadd.f32 %v462, %v554
        %v556 = vpop.f32.mrb[0].mxu0
        %557 = vmatprep.mubr.f32.mxu0 0.0
        %558 = vmatmul.mubr.f32.gmra.mrb[0].mxu0 %v429
        %v559 = vpop.f32.mrb[0].mxu0
        %v560 = vadd.f32 %v462, %v559
        %v561 = vpop.f32.mrb[0].mxu0
        %562 = vmatprep.mubr.f32.mxu0 0.0
        %563 = vmatmul.mubr.f32.gmra.mrb[0].mxu0 %v430
        %v564 = vpop.f32.mrb[0].mxu0
        %v565 = vadd.f32 %v462, %v564
        %v566 = vpop.f32.mrb[0].mxu0
        %567 = vmatprep.mubr.f32.mxu0 0.0
        %568 = vmatmul.mubr.f32.gmra.mrb[0].mxu0 %v431
        %v569 = vpop.f32.mrb[0].mxu0
        %v570 = vadd.f32 %v462, %v569
        %v571 = vpop.f32.mrb[0].mxu0
        %572 = vmatprep.mubr.f32.mxu0 0.0
        %573 = vmatmul.mubr.f32.gmra.mrb[0].mxu0 %v432
        %v574 = vpop.f32.mrb[0].mxu0
        %v575 = vadd.f32 %v462, %v574
        %v576 = vpop.f32.mrb[0].mxu0
        %577 = vmatprep.mubr.f32.mxu0 0.0
        %578 = vmatmul.mubr.f32.gmra.mrb[0].mxu0 %v433
        %v579 = vpop.f32.mrb[0].mxu0
        %v580 = vadd.f32 %v462, %v579
        %v581 = vpop.f32.mrb[0].mxu0
        %582 = vmatprep.mubr.f32.mxu0 0.0
        %583 = vmatmul.mubr.f32.gmra.mrb[0].mxu0 %v434
        %v584 = vpop.f32.mrb[0].mxu0
        %v585 = vadd.f32 %v462, %v584
        %v586 = vpop.f32.mrb[0].mxu0
        %587 = vmatprep.mubr.f32.mxu0 0.0
        %588 = vmatmul.mubr.f32.gmra.mrb[0].mxu0 %v435
        %v589 = vpop.f32.mrb[0].mxu0
        %v590 = vadd.f32 %v462, %v589
        %v591 = vpop.f32.mrb[0].mxu0
        %592 = vmatprep.mubr.f32.mxu0 0.0
        %593 = vmatmul.mubr.f32.gmra.mrb[0].mxu0 %v436
        %v594 = vpop.f32.mrb[0].mxu0
        %v595 = vadd.f32 %v462, %v594
        %v596 = vpop.f32.mrb[0].mxu0
        %597 = vmatprep.mubr.f32.mxu0 0.0
        %598 = vmatmul.mubr.f32.gmra.mrb[0].mxu0 %v437
        %v599 = vpop.f32.mrb[0].mxu0
        %v600 = vadd.f32 %v462, %v599
        %v601 = vpop.f32.mrb[0].mxu0
        %602 = vmatprep.mubr.f32.mxu0 0.0
        %603 = vmatmul.mubr.f32.gmra.mrb[0].mxu0 %v438
        %v604 = vpop.f32.mrb[0].mxu0
        %v605 = vadd.f32 %v462, %v604
        %v606 = vpop.f32.mrb[0].mxu0
        %607 = vmatprep.mubr.f32.mxu0 0.0
        %608 = vmatmul.mubr.f32.gmra.mrb[0].mxu0 %v439
        %v609 = vpop.f32.mrb[0].mxu0
        %v610 = vadd.f32 %v462, %v609
        %v611 = vpop.f32.mrb[0].mxu0
        %612 = vmatprep.mubr.f32.mxu0 0.0
        %613 = vmatmul.mubr.f32.gmra.mrb[0].mxu0 %v440
        %v614 = vpop.f32.mrb[0].mxu0
        %v615 = vadd.f32 %v462, %v614
        %v616 = vpop.f32.mrb[0].mxu0
        %617 = vmatprep.mubr.f32.mxu0 0.0
        %618 = vmatmul.mubr.f32.gmra.mrb[0].mxu0 %v441
        %v619 = vpop.f32.mrb[0].mxu0
        %v620 = vadd.f32 %v462, %v619
        %v621 = vpop.f32.mrb[0].mxu0
        %622 = vdwg.mxu0
        %v623 = vtanh.pop %v530
        %v624 = vtanh.pop %v535
        %v625 = vtanh.pop %v540
        %v626 = vtanh.pop %v545
        %v627 = vtanh.pop %v550
        %v628 = vtanh.pop %v555
        %v629 = vtanh.pop %v560
        %v630 = vtanh.pop %v565
        %v631 = vtanh.pop %v570
        %v632 = vtanh.pop %v575
        %v633 = vtanh.pop %v580
        %v634 = vtanh.pop %v585
        %v635 = vtanh.pop %v590
        %v636 = vtanh.pop %v595
        %v637 = vtanh.pop %v600
        %v638 = vtanh.pop %v605
        %v639 = vtanh.pop %v610
        %v640 = vtanh.pop %v615
        %v641 = vtanh.pop %v620
        %v642 = vld [vmem:[#allocation8] sm:$0xff]
        %v643 = vld [vmem:[#allocation8 + $0x8] sm:$0xff]
        %v644 = vld [vmem:[#allocation8 + $0x10] sm:$0xff]
        %v645 = vld [vmem:[#allocation8 + $0x18] sm:$0xff]
        %v646 = vld [vmem:[#allocation8 + $0x20] sm:$0xff]
        %v647 = vld [vmem:[#allocation8 + $0x28] sm:$0xff]
        %v648 = vld [vmem:[#allocation8 + $0x30] sm:$0xff]
        %v649 = vld [vmem:[#allocation8 + $0x38] sm:$0xff]
        %v650 = vld [vmem:[#allocation8 + $0x40] sm:$0xff]
        %v651 = vld [vmem:[#allocation8 + $0x48] sm:$0xff]
        %v652 = vld [vmem:[#allocation8 + $0x50] sm:$0xff]
        %v653 = vld [vmem:[#allocation8 + $0x58] sm:$0xff]
        %v654 = vld [vmem:[#allocation8 + $0x60] sm:$0xff]
        %v655 = vld [vmem:[#allocation8 + $0x68] sm:$0xff]
        %v656 = vld [vmem:[#allocation8 + $0x70] sm:$0xff]
        %v657 = vld [vmem:[#allocation8 + $0x78] sm:$0xff]
        %v658 = vld [vmem:[#allocation12 + $0x1] sm:$0x1]
        %v659 = vlaneseq
        %v660 = vshrl.u32 %v659, 7
        %v661 = vsub.s32 0, %v660
        %v662 = vrot.slane %v658, %v661
        %663 = vmatprep.subr.mxu0 0.0
        %664 = vmatpush1.msra.mxu0 %v642
        %665 = vmatprep.subr.mxu0 0.0
        %666 = vmatpush1.msra.mxu0 %v643
        %667 = vmatprep.subr.mxu0 0.0
        %668 = vmatpush1.msra.mxu0 %v644
        %669 = vmatprep.subr.mxu0 0.0
        %670 = vmatpush1.msra.mxu0 %v645
        %671 = vmatprep.subr.mxu0 0.0
        %672 = vmatpush1.msra.mxu0 %v646
        %673 = vmatprep.subr.mxu0 0.0
        %674 = vmatpush1.msra.mxu0 %v647
        %675 = vmatprep.subr.mxu0 0.0
        %676 = vmatpush1.msra.mxu0 %v648
        %677 = vmatprep.subr.mxu0 0.0
        %678 = vmatpush1.msra.mxu0 %v649
        %679 = vmatprep.subr.mxu0 0.0
        %680 = vmatpush1.msra.mxu0 %v650
        %681 = vmatprep.subr.mxu0 0.0
        %682 = vmatpush1.msra.mxu0 %v651
        %683 = vmatprep.subr.mxu0 0.0
        %684 = vmatpush1.msra.mxu0 %v652
        %685 = vmatprep.subr.mxu0 0.0
        %686 = vmatpush1.msra.mxu0 %v653
        %687 = vmatprep.subr.mxu0 0.0
        %688 = vmatpush1.msra.mxu0 %v654
        %689 = vmatprep.subr.mxu0 0.0
        %690 = vmatpush1.msra.mxu0 %v655
        %691 = vmatprep.subr.mxu0 0.0
        %692 = vmatpush1.msra.mxu0 %v656
        %693 = vmatprep.subr.mxu0 0.0
        %694 = vmatpush1.msra.mxu0 %v657
        %695 = vmatprep.subr.mxu0 0.0
        %696 = vmatpush1.msra.mxu0 0.0
        %697 = vmatprep.subr.mxu0 0.0
        %698 = vmatpush1.msra.mxu0 0.0
        %699 = vmatprep.subr.mxu0 0.0
        %700 = vmatpush1.msra.mxu0 0.0
        %701 = vmatprep.subr.mxu0 0.0
        %702 = vmatpush1.msra.mxu0 0.0
        %703 = vmatprep.subr.mxu0 0.0
        %704 = vmatpush1.msra.mxu0 0.0
        %705 = vmatprep.subr.mxu0 0.0
        %706 = vmatpush1.msra.mxu0 0.0
        %707 = vmatprep.subr.mxu0 0.0
        %708 = vmatpush1.msra.mxu0 0.0
        %709 = vmatprep.subr.mxu0 0.0
        %710 = vmatpush1.msra.mxu0 0.0
        %711 = vmatprep.subr.mxu0 0.0
        %712 = vmatpush1.msra.mxu0 0.0
        %713 = vmatprep.subr.mxu0 0.0
        %714 = vmatpush1.msra.mxu0 0.0
        %715 = vmatprep.subr.mxu0 0.0
        %716 = vmatpush1.msra.mxu0 0.0
        %717 = vmatprep.subr.mxu0 0.0
        %718 = vmatpush1.msra.mxu0 0.0
        %719 = vmatprep.subr.mxu0 0.0
        %720 = vmatpush1.msra.mxu0 0.0
        %721 = vmatprep.subr.mxu0 0.0
        %722 = vmatpush1.msra.mxu0 0.0
        %723 = vmatprep.subr.mxu0 0.0
        %724 = vmatpush1.msra.mxu0 0.0
        %725 = vmatprep.subr.mxu0 0.0
        %726 = vmatpush1.msra.mxu0 0.0
        %727 = vmatprep.mubr.f32.mxu0 0.0
        %728 = vmatmul.mubr.f32.gmra.mrb[0].mxu0 %v623
        %v729 = vpop.f32.mrb[0].mxu0
        %v730 = vadd.f32 %v662, %v729
        %v731 = vpop.f32.mrb[0].mxu0
        %732 = vmatprep.mubr.f32.mxu0 0.0
        %733 = vmatmul.mubr.f32.gmra.mrb[0].mxu0 %v624
        %v734 = vpop.f32.mrb[0].mxu0
        %v735 = vadd.f32 %v662, %v734
        %v736 = vpop.f32.mrb[0].mxu0
        %737 = vmatprep.mubr.f32.mxu0 0.0
        %738 = vmatmul.mubr.f32.gmra.mrb[0].mxu0 %v625
        %v739 = vpop.f32.mrb[0].mxu0
        %v740 = vadd.f32 %v662, %v739
        %v741 = vpop.f32.mrb[0].mxu0
        %742 = vmatprep.mubr.f32.mxu0 0.0
        %743 = vmatmul.mubr.f32.gmra.mrb[0].mxu0 %v626
        %v744 = vpop.f32.mrb[0].mxu0
        %v745 = vadd.f32 %v662, %v744
        %v746 = vpop.f32.mrb[0].mxu0
        %747 = vmatprep.mubr.f32.mxu0 0.0
        %748 = vmatmul.mubr.f32.gmra.mrb[0].mxu0 %v627
        %v749 = vpop.f32.mrb[0].mxu0
        %v750 = vadd.f32 %v662, %v749
        %v751 = vpop.f32.mrb[0].mxu0
        %752 = vmatprep.mubr.f32.mxu0 0.0
        %753 = vmatmul.mubr.f32.gmra.mrb[0].mxu0 %v628
        %v754 = vpop.f32.mrb[0].mxu0
        %v755 = vadd.f32 %v662, %v754
        %v756 = vpop.f32.mrb[0].mxu0
        %757 = vmatprep.mubr.f32.mxu0 0.0
        %758 = vmatmul.mubr.f32.gmra.mrb[0].mxu0 %v629
        %v759 = vpop.f32.mrb[0].mxu0
        %v760 = vadd.f32 %v662, %v759
        %v761 = vpop.f32.mrb[0].mxu0
        %762 = vmatprep.mubr.f32.mxu0 0.0
        %763 = vmatmul.mubr.f32.gmra.mrb[0].mxu0 %v630
        %v764 = vpop.f32.mrb[0].mxu0
        %v765 = vadd.f32 %v662, %v764
        %v766 = vpop.f32.mrb[0].mxu0
        %767 = vmatprep.mubr.f32.mxu0 0.0
        %768 = vmatmul.mubr.f32.gmra.mrb[0].mxu0 %v631
        %v769 = vpop.f32.mrb[0].mxu0
        %v770 = vadd.f32 %v662, %v769
        %v771 = vpop.f32.mrb[0].mxu0
        %772 = vmatprep.mubr.f32.mxu0 0.0
        %773 = vmatmul.mubr.f32.gmra.mrb[0].mxu0 %v632
        %v774 = vpop.f32.mrb[0].mxu0
        %v775 = vadd.f32 %v662, %v774
        %v776 = vpop.f32.mrb[0].mxu0
        %777 = vmatprep.mubr.f32.mxu0 0.0
        %778 = vmatmul.mubr.f32.gmra.mrb[0].mxu0 %v633
        %v779 = vpop.f32.mrb[0].mxu0
        %v780 = vadd.f32 %v662, %v779
        %v781 = vpop.f32.mrb[0].mxu0
        %782 = vmatprep.mubr.f32.mxu0 0.0
        %783 = vmatmul.mubr.f32.gmra.mrb[0].mxu0 %v634
        %v784 = vpop.f32.mrb[0].mxu0
        %v785 = vadd.f32 %v662, %v784
        %v786 = vpop.f32.mrb[0].mxu0
        %787 = vmatprep.mubr.f32.mxu0 0.0
        %788 = vmatmul.mubr.f32.gmra.mrb[0].mxu0 %v635
        %v789 = vpop.f32.mrb[0].mxu0
        %v790 = vadd.f32 %v662, %v789
        %v791 = vpop.f32.mrb[0].mxu0
        %792 = vmatprep.mubr.f32.mxu0 0.0
        %793 = vmatmul.mubr.f32.gmra.mrb[0].mxu0 %v636
        %v794 = vpop.f32.mrb[0].mxu0
        %v795 = vadd.f32 %v662, %v794
        %v796 = vpop.f32.mrb[0].mxu0
        %797 = vmatprep.mubr.f32.mxu0 0.0
        %798 = vmatmul.mubr.f32.gmra.mrb[0].mxu0 %v637
        %v799 = vpop.f32.mrb[0].mxu0
        %v800 = vadd.f32 %v662, %v799
        %v801 = vpop.f32.mrb[0].mxu0
        %802 = vmatprep.mubr.f32.mxu0 0.0
        %803 = vmatmul.mubr.f32.gmra.mrb[0].mxu0 %v638
        %v804 = vpop.f32.mrb[0].mxu0
        %v805 = vadd.f32 %v662, %v804
        %v806 = vpop.f32.mrb[0].mxu0
        %807 = vmatprep.mubr.f32.mxu0 0.0
        %808 = vmatmul.mubr.f32.gmra.mrb[0].mxu0 %v639
        %v809 = vpop.f32.mrb[0].mxu0
        %v810 = vadd.f32 %v662, %v809
        %v811 = vpop.f32.mrb[0].mxu0
        %812 = vmatprep.mubr.f32.mxu0 0.0
        %813 = vmatmul.mubr.f32.gmra.mrb[0].mxu0 %v640
        %v814 = vpop.f32.mrb[0].mxu0
        %v815 = vadd.f32 %v662, %v814
        %v816 = vpop.f32.mrb[0].mxu0
        %817 = vmatprep.mubr.f32.mxu0 0.0
        %818 = vmatmul.mubr.f32.gmra.mrb[0].mxu0 %v641
        %v819 = vpop.f32.mrb[0].mxu0
        %v820 = vadd.f32 %v662, %v819
        %v821 = vpop.f32.mrb[0].mxu0
        %822 = vdwg.mxu0
        %v823 = vtanh.pop %v730
        %v824 = vtanh.pop %v735
        %v825 = vtanh.pop %v740
        %v826 = vtanh.pop %v745
        %v827 = vtanh.pop %v750
        %v828 = vtanh.pop %v755
        %v829 = vtanh.pop %v760
        %v830 = vtanh.pop %v765
        %v831 = vtanh.pop %v770
        %v832 = vtanh.pop %v775
        %v833 = vtanh.pop %v780
        %v834 = vtanh.pop %v785
        %v835 = vtanh.pop %v790
        %v836 = vtanh.pop %v795
        %v837 = vtanh.pop %v800
        %v838 = vtanh.pop %v805
        %v839 = vtanh.pop %v810
        %v840 = vtanh.pop %v815
        %v841 = vtanh.pop %v820
        %v842 = vld [vmem:[#allocation9] sm:$0xff]
        %v843 = vld [vmem:[#allocation9 + $0x8] sm:$0xff]
        %v844 = vld [vmem:[#allocation9 + $0x10] sm:$0xff]
        %v845 = vld [vmem:[#allocation9 + $0x18] sm:$0xff]
        %v846 = vld [vmem:[#allocation9 + $0x20] sm:$0xff]
        %v847 = vld [vmem:[#allocation9 + $0x28] sm:$0xff]
        %v848 = vld [vmem:[#allocation9 + $0x30] sm:$0xff]
        %v849 = vld [vmem:[#allocation9 + $0x38] sm:$0xff]
        %v850 = vld [vmem:[#allocation9 + $0x40] sm:$0xff]
        %v851 = vld [vmem:[#allocation9 + $0x48] sm:$0xff]
        %v852 = vld [vmem:[#allocation9 + $0x50] sm:$0xff]
        %v853 = vld [vmem:[#allocation9 + $0x58] sm:$0xff]
        %v854 = vld [vmem:[#allocation9 + $0x60] sm:$0xff]
        %v855 = vld [vmem:[#allocation9 + $0x68] sm:$0xff]
        %v856 = vld [vmem:[#allocation9 + $0x70] sm:$0xff]
        %v857 = vld [vmem:[#allocation9 + $0x78] sm:$0xff]
        %v858 = vld [vmem:[#allocation12 + $0x2] sm:$0x1]
        %v859 = vlaneseq
        %v860 = vshrl.u32 %v859, 7
        %v861 = vsub.s32 0, %v860
        %v862 = vrot.slane %v858, %v861
        %863 = vmatprep.subr.mxu0 0.0
        %864 = vmatpush1.msra.mxu0 %v842
        %865 = vmatprep.subr.mxu0 0.0
        %866 = vmatpush1.msra.mxu0 %v843
        %867 = vmatprep.subr.mxu0 0.0
        %868 = vmatpush1.msra.mxu0 %v844
        %869 = vmatprep.subr.mxu0 0.0
        %870 = vmatpush1.msra.mxu0 %v845
        %871 = vmatprep.subr.mxu0 0.0
        %872 = vmatpush1.msra.mxu0 %v846
        %873 = vmatprep.subr.mxu0 0.0
        %874 = vmatpush1.msra.mxu0 %v847
        %875 = vmatprep.subr.mxu0 0.0
        %876 = vmatpush1.msra.mxu0 %v848
        %877 = vmatprep.subr.mxu0 0.0
        %878 = vmatpush1.msra.mxu0 %v849
        %879 = vmatprep.subr.mxu0 0.0
        %880 = vmatpush1.msra.mxu0 %v850
        %881 = vmatprep.subr.mxu0 0.0
        %882 = vmatpush1.msra.mxu0 %v851
        %883 = vmatprep.subr.mxu0 0.0
        %884 = vmatpush1.msra.mxu0 %v852
        %885 = vmatprep.subr.mxu0 0.0
        %886 = vmatpush1.msra.mxu0 %v853
        %887 = vmatprep.subr.mxu0 0.0
        %888 = vmatpush1.msra.mxu0 %v854
        %889 = vmatprep.subr.mxu0 0.0
        %890 = vmatpush1.msra.mxu0 %v855
        %891 = vmatprep.subr.mxu0 0.0
        %892 = vmatpush1.msra.mxu0 %v856
        %893 = vmatprep.subr.mxu0 0.0
        %894 = vmatpush1.msra.mxu0 %v857
        %895 = vmatprep.subr.mxu0 0.0
        %896 = vmatpush1.msra.mxu0 0.0
        %897 = vmatprep.subr.mxu0 0.0
        %898 = vmatpush1.msra.mxu0 0.0
        %899 = vmatprep.subr.mxu0 0.0
        %900 = vmatpush1.msra.mxu0 0.0
        %901 = vmatprep.subr.mxu0 0.0
        %902 = vmatpush1.msra.mxu0 0.0
        %903 = vmatprep.subr.mxu0 0.0
        %904 = vmatpush1.msra.mxu0 0.0
        %905 = vmatprep.subr.mxu0 0.0
        %906 = vmatpush1.msra.mxu0 0.0
        %907 = vmatprep.subr.mxu0 0.0
        %908 = vmatpush1.msra.mxu0 0.0
        %909 = vmatprep.subr.mxu0 0.0
        %910 = vmatpush1.msra.mxu0 0.0
        %911 = vmatprep.subr.mxu0 0.0
        %912 = vmatpush1.msra.mxu0 0.0
        %913 = vmatprep.subr.mxu0 0.0
        %914 = vmatpush1.msra.mxu0 0.0
        %915 = vmatprep.subr.mxu0 0.0
        %916 = vmatpush1.msra.mxu0 0.0
        %917 = vmatprep.subr.mxu0 0.0
        %918 = vmatpush1.msra.mxu0 0.0
        %919 = vmatprep.subr.mxu0 0.0
        %920 = vmatpush1.msra.mxu0 0.0
        %921 = vmatprep.subr.mxu0 0.0
        %922 = vmatpush1.msra.mxu0 0.0
        %923 = vmatprep.subr.mxu0 0.0
        %924 = vmatpush1.msra.mxu0 0.0
        %925 = vmatprep.subr.mxu0 0.0
        %926 = vmatpush1.msra.mxu0 0.0
        %927 = vmatprep.mubr.f32.mxu0 0.0
        %928 = vmatmul.mubr.f32.gmra.mrb[0].mxu0 %v823
        %v929 = vpop.f32.mrb[0].mxu0
        %v930 = vadd.f32 %v862, %v929
        %v931 = vpop.f32.mrb[0].mxu0
        %932 = vmatprep.mubr.f32.mxu0 0.0
        %933 = vmatmul.mubr.f32.gmra.mrb[0].mxu0 %v824
        %v934 = vpop.f32.mrb[0].mxu0
        %v935 = vadd.f32 %v862, %v934
        %v936 = vpop.f32.mrb[0].mxu0
        %937 = vmatprep.mubr.f32.mxu0 0.0
        %938 = vmatmul.mubr.f32.gmra.mrb[0].mxu0 %v825
        %v939 = vpop.f32.mrb[0].mxu0
        %v940 = vadd.f32 %v862, %v939
        %v941 = vpop.f32.mrb[0].mxu0
        %942 = vmatprep.mubr.f32.mxu0 0.0
        %943 = vmatmul.mubr.f32.gmra.mrb[0].mxu0 %v826
        %v944 = vpop.f32.mrb[0].mxu0
        %v945 = vadd.f32 %v862, %v944
        %v946 = vpop.f32.mrb[0].mxu0
        %947 = vmatprep.mubr.f32.mxu0 0.0
        %948 = vmatmul.mubr.f32.gmra.mrb[0].mxu0 %v827
        %v949 = vpop.f32.mrb[0].mxu0
        %v950 = vadd.f32 %v862, %v949
        %v951 = vpop.f32.mrb[0].mxu0
        %952 = vmatprep.mubr.f32.mxu0 0.0
        %953 = vmatmul.mubr.f32.gmra.mrb[0].mxu0 %v828
        %v954 = vpop.f32.mrb[0].mxu0
        %v955 = vadd.f32 %v862, %v954
        %v956 = vpop.f32.mrb[0].mxu0
        %957 = vmatprep.mubr.f32.mxu0 0.0
        %958 = vmatmul.mubr.f32.gmra.mrb[0].mxu0 %v829
        %v959 = vpop.f32.mrb[0].mxu0
        %v960 = vadd.f32 %v862, %v959
        %v961 = vpop.f32.mrb[0].mxu0
        %962 = vmatprep.mubr.f32.mxu0 0.0
        %963 = vmatmul.mubr.f32.gmra.mrb[0].mxu0 %v830
        %v964 = vpop.f32.mrb[0].mxu0
        %v965 = vadd.f32 %v862, %v964
        %v966 = vpop.f32.mrb[0].mxu0
        %967 = vmatprep.mubr.f32.mxu0 0.0
        %968 = vmatmul.mubr.f32.gmra.mrb[0].mxu0 %v831
        %v969 = vpop.f32.mrb[0].mxu0
        %v970 = vadd.f32 %v862, %v969
        %v971 = vpop.f32.mrb[0].mxu0
        %972 = vmatprep.mubr.f32.mxu0 0.0
        %973 = vmatmul.mubr.f32.gmra.mrb[0].mxu0 %v832
        %v974 = vpop.f32.mrb[0].mxu0
        %v975 = vadd.f32 %v862, %v974
        %v976 = vpop.f32.mrb[0].mxu0
        %977 = vmatprep.mubr.f32.mxu0 0.0
        %978 = vmatmul.mubr.f32.gmra.mrb[0].mxu0 %v833
        %v979 = vpop.f32.mrb[0].mxu0
        %v980 = vadd.f32 %v862, %v979
        %v981 = vpop.f32.mrb[0].mxu0
        %982 = vmatprep.mubr.f32.mxu0 0.0
        %983 = vmatmul.mubr.f32.gmra.mrb[0].mxu0 %v834
        %v984 = vpop.f32.mrb[0].mxu0
        %v985 = vadd.f32 %v862, %v984
        %v986 = vpop.f32.mrb[0].mxu0
        %987 = vmatprep.mubr.f32.mxu0 0.0
        %988 = vmatmul.mubr.f32.gmra.mrb[0].mxu0 %v835
        %v989 = vpop.f32.mrb[0].mxu0
        %v990 = vadd.f32 %v862, %v989
        %v991 = vpop.f32.mrb[0].mxu0
        %992 = vmatprep.mubr.f32.mxu0 0.0
        %993 = vmatmul.mubr.f32.gmra.mrb[0].mxu0 %v836
        %v994 = vpop.f32.mrb[0].mxu0
        %v995 = vadd.f32 %v862, %v994
        %v996 = vpop.f32.mrb[0].mxu0
        %997 = vmatprep.mubr.f32.mxu0 0.0
        %998 = vmatmul.mubr.f32.gmra.mrb[0].mxu0 %v837
        %v999 = vpop.f32.mrb[0].mxu0
        %v1000 = vadd.f32 %v862, %v999
        %v1001 = vpop.f32.mrb[0].mxu0
        %1002 = vmatprep.mubr.f32.mxu0 0.0
        %1003 = vmatmul.mubr.f32.gmra.mrb[0].mxu0 %v838
        %v1004 = vpop.f32.mrb[0].mxu0
        %v1005 = vadd.f32 %v862, %v1004
        %v1006 = vpop.f32.mrb[0].mxu0
        %1007 = vmatprep.mubr.f32.mxu0 0.0
        %1008 = vmatmul.mubr.f32.gmra.mrb[0].mxu0 %v839
        %v1009 = vpop.f32.mrb[0].mxu0
        %v1010 = vadd.f32 %v862, %v1009
        %v1011 = vpop.f32.mrb[0].mxu0
        %1012 = vmatprep.mubr.f32.mxu0 0.0
        %1013 = vmatmul.mubr.f32.gmra.mrb[0].mxu0 %v840
        %v1014 = vpop.f32.mrb[0].mxu0
        %v1015 = vadd.f32 %v862, %v1014
        %v1016 = vpop.f32.mrb[0].mxu0
        %1017 = vmatprep.mubr.f32.mxu0 0.0
        %1018 = vmatmul.mubr.f32.gmra.mrb[0].mxu0 %v841
        %v1019 = vpop.f32.mrb[0].mxu0
        %v1020 = vadd.f32 %v862, %v1019
        %v1021 = vpop.f32.mrb[0].mxu0
        %1022 = vdwg.mxu0
        %v1023 = vtanh.pop %v930
        %v1024 = vtanh.pop %v935
        %v1025 = vtanh.pop %v940
        %v1026 = vtanh.pop %v945
        %v1027 = vtanh.pop %v950
        %v1028 = vtanh.pop %v955
        %v1029 = vtanh.pop %v960
        %v1030 = vtanh.pop %v965
        %v1031 = vtanh.pop %v970
        %v1032 = vtanh.pop %v975
        %v1033 = vtanh.pop %v980
        %v1034 = vtanh.pop %v985
        %v1035 = vtanh.pop %v990
        %v1036 = vtanh.pop %v995
        %v1037 = vtanh.pop %v1000
        %v1038 = vtanh.pop %v1005
        %v1039 = vtanh.pop %v1010
        %v1040 = vtanh.pop %v1015
        %v1041 = vtanh.pop %v1020
        %v1042 = vld [vmem:[#allocation11] sm:$0xff]
        %v1043 = vld [vmem:[#allocation11 + $0x8] sm:$0xff]
        %v1044 = vld [vmem:[#allocation11 + $0x10] sm:$0xff]
        %v1045 = vld [vmem:[#allocation11 + $0x18] sm:$0xff]
        %v1046 = vld [vmem:[#allocation11 + $0x20] sm:$0xff]
        %v1047 = vld [vmem:[#allocation11 + $0x28] sm:$0xff]
        %v1048 = vld [vmem:[#allocation11 + $0x30] sm:$0xff]
        %v1049 = vld [vmem:[#allocation11 + $0x38] sm:$0xff]
        %v1050 = vld [vmem:[#allocation11 + $0x40] sm:$0xff]
        %v1051 = vld [vmem:[#allocation11 + $0x48] sm:$0xff]
        %v1052 = vld [vmem:[#allocation11 + $0x50] sm:$0xff]
        %v1053 = vld [vmem:[#allocation11 + $0x58] sm:$0xff]
        %v1054 = vld [vmem:[#allocation11 + $0x60] sm:$0xff]
        %v1055 = vld [vmem:[#allocation11 + $0x68] sm:$0xff]
        %v1056 = vld [vmem:[#allocation11 + $0x70] sm:$0xff]
        %v1057 = vld [vmem:[#allocation11 + $0x78] sm:$0xff]
        %v1058 = vld [vmem:[#allocation12 + $0x3] sm:$0x1]
        %v1059 = vlaneseq
        %v1060 = vshrl.u32 %v1059, 7
        %v1061 = vsub.s32 0, %v1060
        %v1062 = vrot.slane %v1058, %v1061
        %1063 = vmatprep.subr.mxu0 0.0
        %1064 = vmatpush1.msra.mxu0 %v1042
        %1065 = vmatprep.subr.mxu0 0.0
        %1066 = vmatpush1.msra.mxu0 %v1043
        %1067 = vmatprep.subr.mxu0 0.0
        %1068 = vmatpush1.msra.mxu0 %v1044
        %1069 = vmatprep.subr.mxu0 0.0
        %1070 = vmatpush1.msra.mxu0 %v1045
        %1071 = vmatprep.subr.mxu0 0.0
        %1072 = vmatpush1.msra.mxu0 %v1046
        %1073 = vmatprep.subr.mxu0 0.0
        %1074 = vmatpush1.msra.mxu0 %v1047
        %1075 = vmatprep.subr.mxu0 0.0
        %1076 = vmatpush1.msra.mxu0 %v1048
        %1077 = vmatprep.subr.mxu0 0.0
        %1078 = vmatpush1.msra.mxu0 %v1049
        %1079 = vmatprep.subr.mxu0 0.0
        %1080 = vmatpush1.msra.mxu0 %v1050
        %1081 = vmatprep.subr.mxu0 0.0
        %1082 = vmatpush1.msra.mxu0 %v1051
        %1083 = vmatprep.subr.mxu0 0.0
        %1084 = vmatpush1.msra.mxu0 %v1052
        %1085 = vmatprep.subr.mxu0 0.0
        %1086 = vmatpush1.msra.mxu0 %v1053
        %1087 = vmatprep.subr.mxu0 0.0
        %1088 = vmatpush1.msra.mxu0 %v1054
        %1089 = vmatprep.subr.mxu0 0.0
        %1090 = vmatpush1.msra.mxu0 %v1055
        %1091 = vmatprep.subr.mxu0 0.0
        %1092 = vmatpush1.msra.mxu0 %v1056
        %1093 = vmatprep.subr.mxu0 0.0
        %1094 = vmatpush1.msra.mxu0 %v1057
        %1095 = vmatprep.subr.mxu0 0.0
        %1096 = vmatpush1.msra.mxu0 0.0
        %1097 = vmatprep.subr.mxu0 0.0
        %1098 = vmatpush1.msra.mxu0 0.0
        %1099 = vmatprep.subr.mxu0 0.0
        %1100 = vmatpush1.msra.mxu0 0.0
        %1101 = vmatprep.subr.mxu0 0.0
        %1102 = vmatpush1.msra.mxu0 0.0
        %1103 = vmatprep.subr.mxu0 0.0
        %1104 = vmatpush1.msra.mxu0 0.0
        %1105 = vmatprep.subr.mxu0 0.0
        %1106 = vmatpush1.msra.mxu0 0.0
        %1107 = vmatprep.subr.mxu0 0.0
        %1108 = vmatpush1.msra.mxu0 0.0
        %1109 = vmatprep.subr.mxu0 0.0
        %1110 = vmatpush1.msra.mxu0 0.0
        %1111 = vmatprep.subr.mxu0 0.0
        %1112 = vmatpush1.msra.mxu0 0.0
        %1113 = vmatprep.subr.mxu0 0.0
        %1114 = vmatpush1.msra.mxu0 0.0
        %1115 = vmatprep.subr.mxu0 0.0
        %1116 = vmatpush1.msra.mxu0 0.0
        %1117 = vmatprep.subr.mxu0 0.0
        %1118 = vmatpush1.msra.mxu0 0.0
        %1119 = vmatprep.subr.mxu0 0.0
        %1120 = vmatpush1.msra.mxu0 0.0
        %1121 = vmatprep.subr.mxu0 0.0
        %1122 = vmatpush1.msra.mxu0 0.0
        %1123 = vmatprep.subr.mxu0 0.0
        %1124 = vmatpush1.msra.mxu0 0.0
        %1125 = vmatprep.subr.mxu0 0.0
        %1126 = vmatpush1.msra.mxu0 0.0
        %1127 = vmatprep.mubr.f32.mxu0 0.0
        %1128 = vmatmul.mubr.f32.gmra.mrb[0].mxu0 %v1023
        %v1129 = vpop.f32.mrb[0].mxu0
        %v1130 = vadd.f32 %v1062, %v1129
        %v1131 = vpop.f32.mrb[0].mxu0
        %1132 = vmatprep.mubr.f32.mxu0 0.0
        %1133 = vmatmul.mubr.f32.gmra.mrb[0].mxu0 %v1024
        %v1134 = vpop.f32.mrb[0].mxu0
        %v1135 = vadd.f32 %v1062, %v1134
        %v1136 = vpop.f32.mrb[0].mxu0
        %1137 = vmatprep.mubr.f32.mxu0 0.0
        %1138 = vmatmul.mubr.f32.gmra.mrb[0].mxu0 %v1025
        %v1139 = vpop.f32.mrb[0].mxu0
        %v1140 = vadd.f32 %v1062, %v1139
        %v1141 = vpop.f32.mrb[0].mxu0
        %1142 = vmatprep.mubr.f32.mxu0 0.0
        %1143 = vmatmul.mubr.f32.gmra.mrb[0].mxu0 %v1026
        %v1144 = vpop.f32.mrb[0].mxu0
        %v1145 = vadd.f32 %v1062, %v1144
        %v1146 = vpop.f32.mrb[0].mxu0
        %1147 = vmatprep.mubr.f32.mxu0 0.0
        %1148 = vmatmul.mubr.f32.gmra.mrb[0].mxu0 %v1027
        %v1149 = vpop.f32.mrb[0].mxu0
        %v1150 = vadd.f32 %v1062, %v1149
        %v1151 = vpop.f32.mrb[0].mxu0
        %1152 = vmatprep.mubr.f32.mxu0 0.0
        %1153 = vmatmul.mubr.f32.gmra.mrb[0].mxu0 %v1028
        %v1154 = vpop.f32.mrb[0].mxu0
        %v1155 = vadd.f32 %v1062, %v1154
        %v1156 = vpop.f32.mrb[0].mxu0
        %1157 = vmatprep.mubr.f32.mxu0 0.0
        %1158 = vmatmul.mubr.f32.gmra.mrb[0].mxu0 %v1029
        %v1159 = vpop.f32.mrb[0].mxu0
        %v1160 = vadd.f32 %v1062, %v1159
        %v1161 = vpop.f32.mrb[0].mxu0
        %1162 = vmatprep.mubr.f32.mxu0 0.0
        %1163 = vmatmul.mubr.f32.gmra.mrb[0].mxu0 %v1030
        %v1164 = vpop.f32.mrb[0].mxu0
        %v1165 = vadd.f32 %v1062, %v1164
        %v1166 = vpop.f32.mrb[0].mxu0
        %1167 = vmatprep.mubr.f32.mxu0 0.0
        %1168 = vmatmul.mubr.f32.gmra.mrb[0].mxu0 %v1031
        %v1169 = vpop.f32.mrb[0].mxu0
        %v1170 = vadd.f32 %v1062, %v1169
        %v1171 = vpop.f32.mrb[0].mxu0
        %1172 = vmatprep.mubr.f32.mxu0 0.0
        %1173 = vmatmul.mubr.f32.gmra.mrb[0].mxu0 %v1032
        %v1174 = vpop.f32.mrb[0].mxu0
        %v1175 = vadd.f32 %v1062, %v1174
        %v1176 = vpop.f32.mrb[0].mxu0
        %1177 = vmatprep.mubr.f32.mxu0 0.0
        %1178 = vmatmul.mubr.f32.gmra.mrb[0].mxu0 %v1033
        %v1179 = vpop.f32.mrb[0].mxu0
        %v1180 = vadd.f32 %v1062, %v1179
        %v1181 = vpop.f32.mrb[0].mxu0
        %1182 = vmatprep.mubr.f32.mxu0 0.0
        %1183 = vmatmul.mubr.f32.gmra.mrb[0].mxu0 %v1034
        %v1184 = vpop.f32.mrb[0].mxu0
        %v1185 = vadd.f32 %v1062, %v1184
        %v1186 = vpop.f32.mrb[0].mxu0
        %1187 = vmatprep.mubr.f32.mxu0 0.0
        %1188 = vmatmul.mubr.f32.gmra.mrb[0].mxu0 %v1035
        %v1189 = vpop.f32.mrb[0].mxu0
        %v1190 = vadd.f32 %v1062, %v1189
        %v1191 = vpop.f32.mrb[0].mxu0
        %1192 = vmatprep.mubr.f32.mxu0 0.0
        %1193 = vmatmul.mubr.f32.gmra.mrb[0].mxu0 %v1036
        %v1194 = vpop.f32.mrb[0].mxu0
        %v1195 = vadd.f32 %v1062, %v1194
        %v1196 = vpop.f32.mrb[0].mxu0
        %1197 = vmatprep.mubr.f32.mxu0 0.0
        %1198 = vmatmul.mubr.f32.gmra.mrb[0].mxu0 %v1037
        %v1199 = vpop.f32.mrb[0].mxu0
        %v1200 = vadd.f32 %v1062, %v1199
        %v1201 = vpop.f32.mrb[0].mxu0
        %1202 = vmatprep.mubr.f32.mxu0 0.0
        %1203 = vmatmul.mubr.f32.gmra.mrb[0].mxu0 %v1038
        %v1204 = vpop.f32.mrb[0].mxu0
        %v1205 = vadd.f32 %v1062, %v1204
        %v1206 = vpop.f32.mrb[0].mxu0
        %1207 = vmatprep.mubr.f32.mxu0 0.0
        %1208 = vmatmul.mubr.f32.gmra.mrb[0].mxu0 %v1039
        %v1209 = vpop.f32.mrb[0].mxu0
        %v1210 = vadd.f32 %v1062, %v1209
        %v1211 = vpop.f32.mrb[0].mxu0
        %1212 = vmatprep.mubr.f32.mxu0 0.0
        %1213 = vmatmul.mubr.f32.gmra.mrb[0].mxu0 %v1040
        %v1214 = vpop.f32.mrb[0].mxu0
        %v1215 = vadd.f32 %v1062, %v1214
        %v1216 = vpop.f32.mrb[0].mxu0
        %1217 = vmatprep.mubr.f32.mxu0 0.0
        %1218 = vmatmul.mubr.f32.gmra.mrb[0].mxu0 %v1041
        %v1219 = vpop.f32.mrb[0].mxu0
        %v1220 = vadd.f32 %v1062, %v1219
        %v1221 = vpop.f32.mrb[0].mxu0
        %1222 = vdwg.mxu0
        %v1223 = vtanh.pop %v1130
        %v1224 = vtanh.pop %v1135
        %v1225 = vtanh.pop %v1140
        %v1226 = vtanh.pop %v1145
        %v1227 = vtanh.pop %v1150
        %v1228 = vtanh.pop %v1155
        %v1229 = vtanh.pop %v1160
        %v1230 = vtanh.pop %v1165
        %v1231 = vtanh.pop %v1170
        %v1232 = vtanh.pop %v1175
        %v1233 = vtanh.pop %v1180
        %v1234 = vtanh.pop %v1185
        %v1235 = vtanh.pop %v1190
        %v1236 = vtanh.pop %v1195
        %v1237 = vtanh.pop %v1200
        %v1238 = vtanh.pop %v1205
        %v1239 = vtanh.pop %v1210
        %v1240 = vtanh.pop %v1215
        %v1241 = vtanh.pop %v1220
        %1242 = vst [vmem:[%s412] sm:$0xff] %v1223
        %1243 = vst [vmem:[%s412 + $0x8] sm:$0xff] %v1224
        %1244 = vst [vmem:[%s412 + $0x10] sm:$0xff] %v1225
        %1245 = vst [vmem:[%s412 + $0x18] sm:$0xff] %v1226
        %1246 = vst [vmem:[%s412 + $0x20] sm:$0xff] %v1227
        %1247 = vst [vmem:[%s412 + $0x28] sm:$0xff] %v1228
        %1248 = vst [vmem:[%s412 + $0x30] sm:$0xff] %v1229
        %1249 = vst [vmem:[%s412 + $0x38] sm:$0xff] %v1230
        %1250 = vst [vmem:[%s412 + $0x40] sm:$0xff] %v1231
        %1251 = vst [vmem:[%s412 + $0x48] sm:$0xff] %v1232
        %1252 = vst [vmem:[%s412 + $0x50] sm:$0xff] %v1233
        %1253 = vst [vmem:[%s412 + $0x58] sm:$0xff] %v1234
        %1254 = vst [vmem:[%s412 + $0x60] sm:$0xff] %v1235
        %1255 = vst [vmem:[%s412 + $0x68] sm:$0xff] %v1236
        %1256 = vst [vmem:[%s412 + $0x70] sm:$0xff] %v1237
        %1257 = vst [vmem:[%s412 + $0x78] sm:$0xff] %v1238
        %1258 = vst [vmem:[%s412 + $0x80] sm:$0xff] %v1239
        %1259 = vst [vmem:[%s412 + $0x88] sm:$0xff] %v1240
        %1260 = vst [vmem:[%s412 + $0x90] sm:$0xff] %v1241
        %1261 = vst [vmem:[#allocation2] sm:$0xff] %v423
        %1262 = vst [vmem:[#allocation2 + $0x10] sm:$0xff] %v424
        %1263 = vst [vmem:[#allocation2 + $0x20] sm:$0xff] %v425
        %1264 = vst [vmem:[#allocation2 + $0x30] sm:$0xff] %v426
        %1265 = vst [vmem:[#allocation2 + $0x40] sm:$0xff] %v427
        %1266 = vst [vmem:[#allocation2 + $0x50] sm:$0xff] %v428
        %1267 = vst [vmem:[#allocation2 + $0x60] sm:$0xff] %v429
        %1268 = vst [vmem:[#allocation2 + $0x70] sm:$0xff] %v430
        %1269 = vst [vmem:[#allocation2 + $0x80] sm:$0xff] %v431
        %1270 = vst [vmem:[#allocation2 + $0x90] sm:$0xff] %v432
        %1271 = vst [vmem:[#allocation2 + $0xa0] sm:$0xff] %v433
        %1272 = vst [vmem:[#allocation2 + $0xb0] sm:$0xff] %v434
        %1273 = vst [vmem:[#allocation2 + $0xc0] sm:$0xff] %v435
        %1274 = vst [vmem:[#allocation2 + $0xd0] sm:$0xff] %v436
        %1275 = vst [vmem:[#allocation2 + $0xe0] sm:$0xff] %v437
        %1276 = vst [vmem:[#allocation2 + $0xf0] sm:$0xff] %v438
        %1277 = vst [vmem:[#allocation2 + $0x100] sm:$0xff] %v439
        %1278 = vst [vmem:[#allocation2 + $0x110] sm:$0xff] %v440
        %1279 = vst [vmem:[#allocation2 + $0x120] sm:$0xff] %v441
        %1280 = vst [vmem:[#allocation2 + $0x8] sm:$0xff] %v1223
        %1281 = vst [vmem:[#allocation2 + $0x18] sm:$0xff] %v1224
        %1282 = vst [vmem:[#allocation2 + $0x28] sm:$0xff] %v1225
        %1283 = vst [vmem:[#allocation2 + $0x38] sm:$0xff] %v1226
        %1284 = vst [vmem:[#allocation2 + $0x48] sm:$0xff] %v1227
        %1285 = vst [vmem:[#allocation2 + $0x58] sm:$0xff] %v1228
        %1286 = vst [vmem:[#allocation2 + $0x68] sm:$0xff] %v1229
        %1287 = vst [vmem:[#allocation2 + $0x78] sm:$0xff] %v1230
        %1288 = vst [vmem:[#allocation2 + $0x88] sm:$0xff] %v1231
        %1289 = vst [vmem:[#allocation2 + $0x98] sm:$0xff] %v1232
        %1290 = vst [vmem:[#allocation2 + $0xa8] sm:$0xff] %v1233
        %1291 = vst [vmem:[#allocation2 + $0xb8] sm:$0xff] %v1234
        %1292 = vst [vmem:[#allocation2 + $0xc8] sm:$0xff] %v1235
        %1293 = vst [vmem:[#allocation2 + $0xd8] sm:$0xff] %v1236
        %1294 = vst [vmem:[#allocation2 + $0xe8] sm:$0xff] %v1237
        %1295 = vst [vmem:[#allocation2 + $0xf8] sm:$0xff] %v1238
        %1296 = vst [vmem:[#allocation2 + $0x108] sm:$0xff] %v1239
        %1297 = vst [vmem:[#allocation2 + $0x118] sm:$0xff] %v1240
        %1298 = vst [vmem:[#allocation2 + $0x128] sm:$0xff] %v1241
        %v1299 = vld [vmem:[#allocation2] sm:$0xff]
        %v1300 = vld [vmem:[#allocation2 + $0x8] sm:$0xff]
        %v1301 = vld [vmem:[#allocation2 + $0x10] sm:$0xff]
        %v1302 = vld [vmem:[#allocation2 + $0x18] sm:$0xff]
        %v1303 = vld [vmem:[#allocation2 + $0x20] sm:$0xff]
        %v1304 = vld [vmem:[#allocation2 + $0x28] sm:$0xff]
        %v1305 = vld [vmem:[#allocation2 + $0x30] sm:$0xff]
        %v1306 = vld [vmem:[#allocation2 + $0x38] sm:$0xff]
        %v1307 = vld [vmem:[#allocation2 + $0x40] sm:$0xff]
        %v1308 = vld [vmem:[#allocation2 + $0x48] sm:$0xff]
        %v1309 = vld [vmem:[#allocation2 + $0x50] sm:$0xff]
        %v1310 = vld [vmem:[#allocation2 + $0x58] sm:$0xff]
        %v1311 = vld [vmem:[#allocation2 + $0x60] sm:$0xff]
        %v1312 = vld [vmem:[#allocation2 + $0x68] sm:$0xff]
        %v1313 = vld [vmem:[#allocation2 + $0x70] sm:$0xff]
        %v1314 = vld [vmem:[#allocation2 + $0x78] sm:$0xff]
        %v1315 = vld [vmem:[#allocation2 + $0x80] sm:$0xff]
        %v1316 = vld [vmem:[#allocation2 + $0x88] sm:$0xff]
        %v1317 = vld [vmem:[#allocation2 + $0x90] sm:$0xff]
        %v1318 = vld [vmem:[#allocation2 + $0x98] sm:$0xff]
        %v1319 = vld [vmem:[#allocation2 + $0xa0] sm:$0xff]
        %v1320 = vld [vmem:[#allocation2 + $0xa8] sm:$0xff]
        %v1321 = vld [vmem:[#allocation2 + $0xb0] sm:$0xff]
        %v1322 = vld [vmem:[#allocation2 + $0xb8] sm:$0xff]
        %v1323 = vld [vmem:[#allocation2 + $0xc0] sm:$0xff]
        %v1324 = vld [vmem:[#allocation2 + $0xc8] sm:$0xff]
        %v1325 = vld [vmem:[#allocation2 + $0xd0] sm:$0xff]
        %v1326 = vld [vmem:[#allocation2 + $0xd8] sm:$0xff]
        %v1327 = vld [vmem:[#allocation2 + $0xe0] sm:$0xff]
        %v1328 = vld [vmem:[#allocation2 + $0xe8] sm:$0xff]
        %v1329 = vld [vmem:[#allocation2 + $0xf0] sm:$0xff]
        %v1330 = vld [vmem:[#allocation2 + $0xf8] sm:$0xff]
        %v1331 = vld [vmem:[#allocation2 + $0x100] sm:$0xff]
        %v1332 = vld [vmem:[#allocation2 + $0x108] sm:$0xff]
        %v1333 = vld [vmem:[#allocation2 + $0x110] sm:$0xff]
        %v1334 = vld [vmem:[#allocation2 + $0x118] sm:$0xff]
        %v1335 = vld [vmem:[#allocation2 + $0x120] sm:$0xff]
        %v1336 = vld [vmem:[#allocation2 + $0x128] sm:$0xff]
        %v1337 = vld [vmem:[#allocation14] sm:$0xff]
        %v1338 = vld [vmem:[#allocation14 + $0x8] sm:$0xff]
        %v1339 = vld [vmem:[#allocation14 + $0x10] sm:$0xff]
        %v1340 = vld [vmem:[#allocation14 + $0x18] sm:$0xff]
        %v1341 = vld [vmem:[#allocation14 + $0x20] sm:$0xff]
        %v1342 = vld [vmem:[#allocation14 + $0x28] sm:$0xff]
        %v1343 = vld [vmem:[#allocation14 + $0x30] sm:$0xff]
        %v1344 = vld [vmem:[#allocation14 + $0x38] sm:$0xff]
        %v1345 = vld [vmem:[#allocation14 + $0x40] sm:$0xff]
        %v1346 = vld [vmem:[#allocation14 + $0x48] sm:$0xff]
        %v1347 = vld [vmem:[#allocation14 + $0x50] sm:$0xff]
        %v1348 = vld [vmem:[#allocation14 + $0x58] sm:$0xff]
        %v1349 = vld [vmem:[#allocation14 + $0x60] sm:$0xff]
        %v1350 = vld [vmem:[#allocation14 + $0x68] sm:$0xff]
        %v1351 = vld [vmem:[#allocation14 + $0x70] sm:$0xff]
        %v1352 = vld [vmem:[#allocation14 + $0x78] sm:$0xff]
        %v1353 = vld [vmem:[#allocation14 + $0x80] sm:$0xff]
        %v1354 = vld [vmem:[#allocation14 + $0x88] sm:$0xff]
        %v1355 = vld [vmem:[#allocation14 + $0x90] sm:$0xff]
        %v1356 = vld [vmem:[#allocation14 + $0x98] sm:$0xff]
        %v1357 = vld [vmem:[#allocation14 + $0xa0] sm:$0xff]
        %v1358 = vld [vmem:[#allocation14 + $0xa8] sm:$0xff]
        %v1359 = vld [vmem:[#allocation14 + $0xb0] sm:$0xff]
        %v1360 = vld [vmem:[#allocation14 + $0xb8] sm:$0xff]
        %v1361 = vld [vmem:[#allocation14 + $0xc0] sm:$0xff]
        %v1362 = vld [vmem:[#allocation14 + $0xc8] sm:$0xff]
        %v1363 = vld [vmem:[#allocation14 + $0xd0] sm:$0xff]
        %v1364 = vld [vmem:[#allocation14 + $0xd8] sm:$0xff]
        %v1365 = vld [vmem:[#allocation14 + $0xe0] sm:$0xff]
        %v1366 = vld [vmem:[#allocation14 + $0xe8] sm:$0xff]
        %v1367 = vld [vmem:[#allocation14 + $0xf0] sm:$0xff]
        %v1368 = vld [vmem:[#allocation14 + $0xf8] sm:$0xff]
        %1369 = vmatprep.subr.mxu0 0.0
        %1370 = vmatpush1.msra.mxu0 %v1337
        %1371 = vmatprep.subr.mxu0 0.0
        %1372 = vmatpush1.msra.mxu0 %v1338
        %1373 = vmatprep.subr.mxu0 0.0
        %1374 = vmatpush1.msra.mxu0 %v1339
        %1375 = vmatprep.subr.mxu0 0.0
        %1376 = vmatpush1.msra.mxu0 %v1340
        %1377 = vmatprep.subr.mxu0 0.0
        %1378 = vmatpush1.msra.mxu0 %v1341
        %1379 = vmatprep.subr.mxu0 0.0
        %1380 = vmatpush1.msra.mxu0 %v1342
        %1381 = vmatprep.subr.mxu0 0.0
        %1382 = vmatpush1.msra.mxu0 %v1343
        %1383 = vmatprep.subr.mxu0 0.0
        %1384 = vmatpush1.msra.mxu0 %v1344
        %1385 = vmatprep.subr.mxu0 0.0
        %1386 = vmatpush1.msra.mxu0 %v1345
        %1387 = vmatprep.subr.mxu0 0.0
        %1388 = vmatpush1.msra.mxu0 %v1346
        %1389 = vmatprep.subr.mxu0 0.0
        %1390 = vmatpush1.msra.mxu0 %v1347
        %1391 = vmatprep.subr.mxu0 0.0
        %1392 = vmatpush1.msra.mxu0 %v1348
        %1393 = vmatprep.subr.mxu0 0.0
        %1394 = vmatpush1.msra.mxu0 %v1349
        %1395 = vmatprep.subr.mxu0 0.0
        %1396 = vmatpush1.msra.mxu0 %v1350
        %1397 = vmatprep.subr.mxu0 0.0
        %1398 = vmatpush1.msra.mxu0 %v1351
        %1399 = vmatprep.subr.mxu0 0.0
        %1400 = vmatpush1.msra.mxu0 %v1352
        %1401 = vmatprep.subr.mxu0 0.0
        %1402 = vmatpush1.msra.mxu0 %v1353
        %1403 = vmatprep.subr.mxu0 0.0
        %1404 = vmatpush1.msra.mxu0 %v1354
        %1405 = vmatprep.subr.mxu0 0.0
        %1406 = vmatpush1.msra.mxu0 %v1355
        %1407 = vmatprep.subr.mxu0 0.0
        %1408 = vmatpush1.msra.mxu0 %v1356
        %1409 = vmatprep.subr.mxu0 0.0
        %1410 = vmatpush1.msra.mxu0 %v1357
        %1411 = vmatprep.subr.mxu0 0.0
        %1412 = vmatpush1.msra.mxu0 %v1358
        %1413 = vmatprep.subr.mxu0 0.0
        %1414 = vmatpush1.msra.mxu0 %v1359
        %1415 = vmatprep.subr.mxu0 0.0
        %1416 = vmatpush1.msra.mxu0 %v1360
        %1417 = vmatprep.subr.mxu0 0.0
        %1418 = vmatpush1.msra.mxu0 %v1361
        %1419 = vmatprep.subr.mxu0 0.0
        %1420 = vmatpush1.msra.mxu0 %v1362
        %1421 = vmatprep.subr.mxu0 0.0
        %1422 = vmatpush1.msra.mxu0 %v1363
        %1423 = vmatprep.subr.mxu0 0.0
        %1424 = vmatpush1.msra.mxu0 %v1364
        %1425 = vmatprep.subr.mxu0 0.0
        %1426 = vmatpush1.msra.mxu0 %v1365
        %1427 = vmatprep.subr.mxu0 0.0
        %1428 = vmatpush1.msra.mxu0 %v1366
        %1429 = vmatprep.subr.mxu0 0.0
        %1430 = vmatpush1.msra.mxu0 %v1367
        %1431 = vmatprep.subr.mxu0 0.0
        %1432 = vmatpush1.msra.mxu0 %v1368
        %1433 = vmatprep.mubr.f32.mxu0 %v1300
        %1434 = vmatmul.mubr.f32.gmra.mrb[0].mxu0 %v1299
        %v1435 = vpop.f32.mrb[0].mxu0
        %v1436 = vadd.f32 0.0, %v1435
        %v1437 = vpop.f32.mrb[0].mxu0
        %1438 = vmatprep.mubr.f32.mxu0 %v1302
        %1439 = vmatmul.mubr.f32.gmra.mrb[0].mxu0 %v1301
        %v1440 = vpop.f32.mrb[0].mxu0
        %v1441 = vadd.f32 0.0, %v1440
        %v1442 = vpop.f32.mrb[0].mxu0
        %1443 = vmatprep.mubr.f32.mxu0 %v1304
        %1444 = vmatmul.mubr.f32.gmra.mrb[0].mxu0 %v1303
        %v1445 = vpop.f32.mrb[0].mxu0
        %v1446 = vadd.f32 0.0, %v1445
        %v1447 = vpop.f32.mrb[0].mxu0
        %1448 = vmatprep.mubr.f32.mxu0 %v1306
        %1449 = vmatmul.mubr.f32.gmra.mrb[0].mxu0 %v1305
        %v1450 = vpop.f32.mrb[0].mxu0
        %v1451 = vadd.f32 0.0, %v1450
        %v1452 = vpop.f32.mrb[0].mxu0
        %1453 = vmatprep.mubr.f32.mxu0 %v1308
        %1454 = vmatmul.mubr.f32.gmra.mrb[0].mxu0 %v1307
        %v1455 = vpop.f32.mrb[0].mxu0
        %v1456 = vadd.f32 0.0, %v1455
        %v1457 = vpop.f32.mrb[0].mxu0
        %1458 = vmatprep.mubr.f32.mxu0 %v1310
        %1459 = vmatmul.mubr.f32.gmra.mrb[0].mxu0 %v1309
        %v1460 = vpop.f32.mrb[0].mxu0
        %v1461 = vadd.f32 0.0, %v1460
        %v1462 = vpop.f32.mrb[0].mxu0
        %1463 = vmatprep.mubr.f32.mxu0 %v1312
        %1464 = vmatmul.mubr.f32.gmra.mrb[0].mxu0 %v1311
        %v1465 = vpop.f32.mrb[0].mxu0
        %v1466 = vadd.f32 0.0, %v1465
        %v1467 = vpop.f32.mrb[0].mxu0
        %1468 = vmatprep.mubr.f32.mxu0 %v1314
        %1469 = vmatmul.mubr.f32.gmra.mrb[0].mxu0 %v1313
        %v1470 = vpop.f32.mrb[0].mxu0
        %v1471 = vadd.f32 0.0, %v1470
        %v1472 = vpop.f32.mrb[0].mxu0
        %1473 = vmatprep.mubr.f32.mxu0 %v1316
        %1474 = vmatmul.mubr.f32.gmra.mrb[0].mxu0 %v1315
        %v1475 = vpop.f32.mrb[0].mxu0
        %v1476 = vadd.f32 0.0, %v1475
        %v1477 = vpop.f32.mrb[0].mxu0
        %1478 = vmatprep.mubr.f32.mxu0 %v1318
        %1479 = vmatmul.mubr.f32.gmra.mrb[0].mxu0 %v1317
        %v1480 = vpop.f32.mrb[0].mxu0
        %v1481 = vadd.f32 0.0, %v1480
        %v1482 = vpop.f32.mrb[0].mxu0
        %1483 = vmatprep.mubr.f32.mxu0 %v1320
        %1484 = vmatmul.mubr.f32.gmra.mrb[0].mxu0 %v1319
        %v1485 = vpop.f32.mrb[0].mxu0
        %v1486 = vadd.f32 0.0, %v1485
        %v1487 = vpop.f32.mrb[0].mxu0
        %1488 = vmatprep.mubr.f32.mxu0 %v1322
        %1489 = vmatmul.mubr.f32.gmra.mrb[0].mxu0 %v1321
        %v1490 = vpop.f32.mrb[0].mxu0
        %v1491 = vadd.f32 0.0, %v1490
        %v1492 = vpop.f32.mrb[0].mxu0
        %1493 = vmatprep.mubr.f32.mxu0 %v1324
        %1494 = vmatmul.mubr.f32.gmra.mrb[0].mxu0 %v1323
        %v1495 = vpop.f32.mrb[0].mxu0
        %v1496 = vadd.f32 0.0, %v1495
        %v1497 = vpop.f32.mrb[0].mxu0
        %1498 = vmatprep.mubr.f32.mxu0 %v1326
        %1499 = vmatmul.mubr.f32.gmra.mrb[0].mxu0 %v1325
        %v1500 = vpop.f32.mrb[0].mxu0
        %v1501 = vadd.f32 0.0, %v1500
        %v1502 = vpop.f32.mrb[0].mxu0
        %1503 = vmatprep.mubr.f32.mxu0 %v1328
        %1504 = vmatmul.mubr.f32.gmra.mrb[0].mxu0 %v1327
        %v1505 = vpop.f32.mrb[0].mxu0
        %v1506 = vadd.f32 0.0, %v1505
        %v1507 = vpop.f32.mrb[0].mxu0
        %1508 = vmatprep.mubr.f32.mxu0 %v1330
        %1509 = vmatmul.mubr.f32.gmra.mrb[0].mxu0 %v1329
        %v1510 = vpop.f32.mrb[0].mxu0
        %v1511 = vadd.f32 0.0, %v1510
        %v1512 = vpop.f32.mrb[0].mxu0
        %1513 = vmatprep.mubr.f32.mxu0 %v1332
        %1514 = vmatmul.mubr.f32.gmra.mrb[0].mxu0 %v1331
        %v1515 = vpop.f32.mrb[0].mxu0
        %v1516 = vadd.f32 0.0, %v1515
        %v1517 = vpop.f32.mrb[0].mxu0
        %1518 = vmatprep.mubr.f32.mxu0 %v1334
        %1519 = vmatmul.mubr.f32.gmra.mrb[0].mxu0 %v1333
        %v1520 = vpop.f32.mrb[0].mxu0
        %v1521 = vadd.f32 0.0, %v1520
        %v1522 = vpop.f32.mrb[0].mxu0
        %1523 = vmatprep.mubr.f32.mxu0 %v1336
        %1524 = vmatmul.mubr.f32.gmra.mrb[0].mxu0 %v1335
        %v1525 = vpop.f32.mrb[0].mxu0
        %v1526 = vadd.f32 0.0, %v1525
        %v1527 = vpop.f32.mrb[0].mxu0
        %1528 = vdwg.mxu0
        %1529 = vst [vmem:[%s419] sm:$0xff] %v1436
        %1530 = vst [vmem:[%s419 + $0x8] sm:$0xff] %v1441
        %1531 = vst [vmem:[%s419 + $0x10] sm:$0xff] %v1446
        %1532 = vst [vmem:[%s419 + $0x18] sm:$0xff] %v1451
        %1533 = vst [vmem:[%s419 + $0x20] sm:$0xff] %v1456
        %1534 = vst [vmem:[%s419 + $0x28] sm:$0xff] %v1461
        %1535 = vst [vmem:[%s419 + $0x30] sm:$0xff] %v1466
        %1536 = vst [vmem:[%s419 + $0x38] sm:$0xff] %v1471
        %1537 = vst [vmem:[%s419 + $0x40] sm:$0xff] %v1476
        %1538 = vst [vmem:[%s419 + $0x48] sm:$0xff] %v1481
        %1539 = vst [vmem:[%s419 + $0x50] sm:$0xff] %v1486
        %1540 = vst [vmem:[%s419 + $0x58] sm:$0xff] %v1491
        %1541 = vst [vmem:[%s419 + $0x60] sm:$0xff] %v1496
        %1542 = vst [vmem:[%s419 + $0x68] sm:$0xff] %v1501
        %1543 = vst [vmem:[%s419 + $0x70] sm:$0xff] %v1506
        %1544 = vst [vmem:[%s419 + $0x78] sm:$0xff] %v1511
        %1545 = vst [vmem:[%s419 + $0x80] sm:$0xff] %v1516
        %1546 = vst [vmem:[%s419 + $0x88] sm:$0xff] %v1521
        %1547 = vst [vmem:[%s419 + $0x90] sm:$0xff] %v1526
        %s1548 = sand.u32 %s192, 1
        %s1549 = scalar_lea.sflag [#allocation5], %s1548
        %s1550 = sand.u32 %s192, 1
        %s1551 = smul.addr %s1550, 152
        %s1552 = scalar_lea.vmem [#allocation15], %s1551
        %s1553 = sand.u32 %s218, 1
        %s1554 = scalar_lea.sflag [#allocation17], %s1553
        %s1555 = sand.u32 %s218, 1
        %s1556 = smul.addr %s1555, 152
        %s1557 = scalar_lea.vmem [#allocation16], %s1556
        // Predicated region
        $region77: #{tpu_custom_call.1} parent=47 // pred_check
          %p1558 = pneg %p202
        $region78: #{tpu_custom_call.1} parent=47 // pred_check_branch
          %1560 = sbr.rel (%p1558) target = $region80
        $region79: #{tpu_custom_call.1} parent=47 // pred_region
          %s1561 = smul.u32 19, %s32
          %s1563 = ssub.s32 2432, 2432
          %1564 = vsyncadd %s1549, %s1563
          %s1565 = smul.addr %s1561, 128
          %s1566 = scalar_lea.hbm %s7, %s1565
          %s1567 = sshll.u32 %s1552, 4
          %s1568 = int_to_ptr.vmem [resolvable:$true] %s1567
          %1573 = dma.vmem_to_hbm [thread:$0]  %s1568, 2432, %s1566, %s1549, 128, 128, 8
        $region80: #{tpu_custom_call.1} parent=47 // pred_fallthru
          _
        // Predicated region
        $region81: #{tpu_custom_call.1} parent=47 // pred_check
          %p1574 = pneg %p228
        $region82: #{tpu_custom_call.1} parent=47 // pred_check_branch
          %1576 = sbr.rel (%p1574) target = $region84
        $region83: #{tpu_custom_call.1} parent=47 // pred_region
          %s1577 = smul.u32 19, %s32
          %s1579 = ssub.s32 2432, 2432
          %1580 = vsyncadd %s1554, %s1579
          %s1581 = smul.addr %s1577, 128
          %s1582 = scalar_lea.hbm %s8, %s1581
          %s1583 = sshll.u32 %s1557, 4
          %s1584 = int_to_ptr.vmem [resolvable:$true] %s1583
          %1589 = dma.vmem_to_hbm [thread:$0]  %s1584, 2432, %s1582, %s1554, 128, 128, 8
        $region84: #{tpu_custom_call.1} parent=47 // pred_fallthru
          _
      $region48: #{tpu_custom_call.1} parent=5 // pred_fallthru
        _
      %p1590 = scmp.le.s32.totalorder 2, %s27
      // Predicated region
      $region85: #{tpu_custom_call.1} parent=5 // pred_check
        %p1591 = pneg %p1590
      $region86: #{tpu_custom_call.1} parent=5 // pred_check_branch
        %1593 = sbr.rel (%p1591) target = $region88
      $region87: #{tpu_custom_call.1} parent=5 // pred_region
        %s1594 = ssub.s32 %s27, 2
        // Predicated region
        $region89: #{tpu_custom_call.1} parent=87 // pred_check
          %p1595 = pneg %p208
        $region90: #{tpu_custom_call.1} parent=87 // pred_check_branch
          %1597 = sbr.rel (%p1595) target = $region92
        $region91: #{tpu_custom_call.1} parent=87 // pred_region
          %s1598 = sand.u32 %s193, 1
          %s1599 = scalar_lea.sflag [#allocation5], %s1598
          %s1600 = sand.u32 %s193, 1
          %s1601 = smul.addr %s1600, 152
          %s1602 = scalar_lea.vmem [#allocation15], %s1601
          %1603 = dma.done %s1599, 2432
        $region92: #{tpu_custom_call.1} parent=87 // pred_fallthru
          _
        // Predicated region
        $region93: #{tpu_custom_call.1} parent=87 // pred_check
          %p1604 = pneg %p234
        $region94: #{tpu_custom_call.1} parent=87 // pred_check_branch
          %1606 = sbr.rel (%p1604) target = $region96
        $region95: #{tpu_custom_call.1} parent=87 // pred_region
          %s1607 = sand.u32 %s219, 1
          %s1608 = scalar_lea.sflag [#allocation17], %s1607
          %s1609 = sand.u32 %s219, 1
          %s1610 = smul.addr %s1609, 152
          %s1611 = scalar_lea.vmem [#allocation16], %s1610
          %1612 = dma.done %s1608, 2432
        $region96: #{tpu_custom_call.1} parent=87 // pred_fallthru
          _
      $region88: #{tpu_custom_call.1} parent=5 // pred_fallthru
        _
    $region6: #{tpu_custom_call.1} parent=1 // loop_footer
      %s31 = sadd.s32 1, %s27
    $region7: #{tpu_custom_call.1} parent=1 // loop_footer_branch
      %26 = sbr.rel target = $region3
    $region8: #{tpu_custom_call.1} parent=1 // loop_exit
      _
    %1613 = vsyncpa [#allocation4], 1
    %s1614 = scalar_lea.sflag [#allocation4], 1
    %1615 = vsyncpa %s1614, 1
    %1616 = vsyncpa [#allocation7], 1
    %1617 = vsyncpa [#allocation10], 1
    %1618 = vsyncpa [#allocation13], 1
    %1619 = vsyncpa [#allocation5], 1
    %s1620 = scalar_lea.sflag [#allocation5], 1
    %1621 = vsyncpa %s1620, 1
    %1622 = vsyncpa [#allocation17], 1
    %s1623 = scalar_lea.sflag [#allocation17], 1
    %1624 = vsyncpa %s1623, 1

</llo_original>
